<compile_context>
chip_gen: v7x
topology: tpu7x:2x2x1
jax: 0.10.0
libtpu: 0.0.40
codegen_flags: <defaults>
</compile_context>

<pallas_src>
import functools

import jax
import jax.numpy as jnp
import numpy as np
from jax.experimental import pallas as pl
from jax.experimental.pallas import tpu as pltpu


# --------------------------------------------------------------------------- #
# Kernels
# --------------------------------------------------------------------------- #
def _resident_kernel(x_ref, adj_ref, w_ref, b_ref, out_ref, *,
                     K, batch_block, matmul_dtype):
    """One batch-block per grid step; adjacency fully resident in VMEM.

    x_ref  : (Bblk, N, C_in)        f32
    adj_ref: (Bblk, N, N)           f32 or bf16
    w_ref  : (K+1, C_in, C_out_p)   f32 (lane-padded)
    b_ref  : (1, C_out_p)           f32 (biases pre-summed over hops)
    out_ref: (Bblk, N, C_out_p)     f32
    """
    # Hoist weight loads / casts out of the batch loop (JAX does not CSE them).
    w = [w_ref[k].astype(matmul_dtype) for k in range(K + 1)]
    bias = b_ref[...]

    for b in range(batch_block):                      # static unroll
        x = x_ref[b]                                              # (N, C_in) f32
        adj_mm = adj_ref[b].astype(matmul_dtype)                  # (N, N); no-op cast if dtypes match
        # Degree from the same (possibly bf16) adjacency the matmuls see; f32 accumulation.
        deg = jnp.sum(adj_ref[b].astype(jnp.float32), axis=-1, keepdims=True)
        d = 1.0 / jnp.sqrt(deg + 1e-6)                            # (N, 1) exact f32

        # hop 0
        acc = jnp.dot(x.astype(matmul_dtype), w[0], preferred_element_type=jnp.float32)

        if K >= 1:
            # L_hat @ t  ==  -d * (A @ (d * t))   (lambda_max == 2 simplification)
            tx_prev = x
            tx_cur = -d * jnp.dot(adj_mm, (d * x).astype(matmul_dtype),
                                  preferred_element_type=jnp.float32)
            acc = acc + jnp.dot(tx_cur.astype(matmul_dtype), w[1],
                                preferred_element_type=jnp.float32)
            for k in range(2, K + 1):
                tx_next = (-2.0 * d) * jnp.dot(adj_mm, (d * tx_cur).astype(matmul_dtype),
                                               preferred_element_type=jnp.float32) - tx_prev
                acc = acc + jnp.dot(tx_next.astype(matmul_dtype), w[k],
                                    preferred_element_type=jnp.float32)
                tx_prev, tx_cur = tx_cur, tx_next

        out_ref[b] = jnp.maximum(acc + bias, 0.0).astype(out_ref.dtype)


def _rowtiled_kernel(x_ref, adj_ref, w_ref, b_ref, out_ref,
                     d_ref, tx0_ref, tx1_ref, acc_ref, *,
                     K, tile_r, matmul_dtype):
    """grid = (B, K+1, N // tile_r).  k_idx == 0 : degree + hop-0 pass;
    k_idx == h (1..K) : one streamed pass over the adjacency row tiles per Chebyshev hop.

    x_ref  : (N, C_in)              resident per batch (batch dim squeezed)
    adj_ref: (tile_r, N)            row tile r of this batch's adjacency
    w_ref  : (K+1, C_in, C_out_p)
    b_ref  : (1, C_out_p)
    out_ref: (tile_r, C_out_p)
    d_ref  : (N, 1)        f32 scratch  (D^-1/2)
    tx0/1  : (N, C_in)     f32 scratch  (Chebyshev carries, ping-pong)
    acc_ref: (N, C_out_p)  f32 scratch  (per-hop projection accumulator)
    """
    k_idx = pl.program_id(1)
    r = pl.program_id(2)
    row0 = pl.multiple_of(r * tile_r, tile_r)
    rows = pl.ds(row0, tile_r)

    adj_rows = adj_ref[...]                                       # (tile_r, N)

    @pl.when(k_idx == 0)
    def _degree_and_hop0():
        deg = jnp.sum(adj_rows.astype(jnp.float32), axis=-1, keepdims=True)
        d_ref[rows, :] = 1.0 / jnp.sqrt(deg + 1e-6)
        x_rows = x_ref[rows, :]
        tx0_ref[rows, :] = x_rows                                 # Tx_0 = x
        acc_ref[rows, :] = jnp.dot(x_rows.astype(matmul_dtype),
                                   w_ref[0].astype(matmul_dtype),
                                   preferred_element_type=jnp.float32)

    slots = (tx0_ref, tx1_ref)
    for h in range(1, K + 1):                                     # static unroll -> static refs
        prev_ref = slots[(h - 1) % 2]   # holds the full Tx_{h-1} (completed in pass h-1)
        next_ref = slots[h % 2]         # holds Tx_{h-2}; its rows are consumed then overwritten

        @pl.when(k_idx == h)
        def _hop(h=h, prev_ref=prev_ref, next_ref=next_ref):
            u = (d_ref[...] * prev_ref[...]).astype(matmul_dtype)             # (N, C_in)
            p = jnp.dot(adj_rows.astype(matmul_dtype), u,
                        preferred_element_type=jnp.float32)                   # (tile_r, C_in)
            d_rows = d_ref[rows, :]
            t_new = (-d_rows) * p                                             # L_hat @ Tx_{h-1}
            if h >= 2:
                t_new = 2.0 * t_new - next_ref[rows, :]                       # - Tx_{h-2}
            next_ref[rows, :] = t_new
            acc_ref[rows, :] = acc_ref[rows, :] + jnp.dot(
                t_new.astype(matmul_dtype), w_ref[h].astype(matmul_dtype),
                preferred_element_type=jnp.float32)

    # Write the current partial for these rows; the output block is revisited once per
    # hop pass and the final (k_idx == K) write-back is the one that sticks.
    out_ref[...] = jnp.maximum(acc_ref[rows, :] + b_ref[...], 0.0).astype(out_ref.dtype)


# --------------------------------------------------------------------------- #
# Generation-aware VMEM budgeting
# --------------------------------------------------------------------------- #
def _vmem_capacity_bytes():
    try:
        info = pltpu.get_tpu_info()
        for attr in ("vmem_capacity_bytes", "vmem_size_bytes", "vmem_bytes"):
            cap = getattr(info, attr, None)
            if cap:
                return int(cap)
    except Exception:
        pass
    try:
        kind = jax.devices()[0].device_kind.lower()
        if "v7" in kind:
            return 64 << 20                       # per-TensorCore on v7x
        if any(t in kind for t in ("v5 lite", "v5e", "v5lite", "v6", "v6e")):
            return 128 << 20
    except Exception:
        pass
    return 64 << 20                               # safe on every generation


def _param_bytes(K, C_in, C_out_p):
    return 4 * ((K + 1) * C_in * C_out_p + C_out_p)


def _resident_vmem_bytes(bblk, N, C_in, C_out_p, K, adj_bytes):
    blocks = bblk * (4 * N * C_in + adj_bytes * N * N + 4 * N * C_out_p)
    # In-kernel temporaries per live batch item: f32 view of adj for the degree
    # reduction (only when adj is low precision), carries, accumulator.
    temps = (4 * N * N if adj_bytes < 4 else 0) + 4 * N * (3 * C_in + C_out_p)
    return int(1.25 * (2 * blocks + _param_bytes(K, C_in, C_out_p) + temps))


def _rowtiled_vmem_bytes(tile_r, N, C_in, C_out_p, K, adj_bytes):
    blocks = 4 * N * C_in + adj_bytes * tile_r * N + 4 * tile_r * C_out_p
    scratch = 4 * (N + 2 * N * C_in + N * C_out_p)
    temps = 4 * tile_r * N + 4 * tile_r * (C_in + C_out_p) + 4 * N * C_in
    return int(1.25 * (2 * blocks + _param_bytes(K, C_in, C_out_p) + scratch + temps))


# --------------------------------------------------------------------------- #
# Wrapper
# --------------------------------------------------------------------------- #
def graph_propagation(x, adj, weights, biases, *, K=3,
                      matmul_dtype=jnp.bfloat16,
                      batch_block=None, force_row_tiled=False, row_tile=None):
    """x: [B, N, C_in], adj: [B, N, N] dense, weights: [K+1, C_in, C_out]
    (pre-transposed: y = x @ W + b), biases: [K+1, C_out]  ->  [B, N, C_out] (f32)."""
    B, N, C_in = x.shape
    kp1, w_cin, C_out = weights.shape
    assert kp1 == K + 1 and w_cin == C_in
    assert adj.shape == (B, N, N)

    LANE = 128
    C_out_p = ((C_out + LANE - 1) // LANE) * LANE

    x = x.astype(jnp.float32)
    # The kernel is HBM-bound on the N^2 adjacency stream: ship adj in the matmul dtype.
    # (In a real model the caller should cast adj once and reuse it across layers/steps.)
    if jnp.dtype(matmul_dtype) != jnp.dtype(jnp.float32) and adj.dtype != jnp.dtype(matmul_dtype):
        adj = adj.astype(matmul_dtype)

    w_stack = jnp.pad(weights.astype(jnp.float32),
                      ((0, 0), (0, 0), (0, C_out_p - C_out)))          # (K+1, C_in, C_out_p)
    b_sum = jnp.pad(jnp.sum(biases.astype(jnp.float32), axis=0),
                    (0, C_out_p - C_out)).reshape(1, C_out_p)

    adj_bytes = jnp.dtype(adj.dtype).itemsize
    budget = int(0.8 * _vmem_capacity_bytes())      # ~102 MiB on 128 MiB parts, ~51 MiB on v7x

    use_tiled = bool(force_row_tiled)
    if not use_tiled and _resident_vmem_bytes(1, N, C_in, C_out_p, K, adj_bytes) > budget:
        use_tiled = (N % 8 == 0)
        # TODO(synk): N not a multiple of 8 with an over-budget adjacency still takes the
        # resident path; a padded / masked row tiling would be needed for that corner.

    if not use_tiled:
        # ---- resident path -------------------------------------------------
        if batch_block is None:
            # Amortize the ~0.35us per-grid-step overhead in the tiny-shape regime.
            target = max(1, min(B, 16, -(-512 // max(N, 1))))
            batch_block = 1
            for cand in range(B, 0, -1):
                if B % cand == 0 and cand <= target and \
                        _resident_vmem_bytes(cand, N, C_in, C_out_p, K, adj_bytes) <= budget:
                    batch_block = cand
                    break
        assert B % batch_block == 0

        kernel = functools.partial(_resident_kernel, K=K, batch_block=batch_block,
                                   matmul_dtype=matmul_dtype)
        out_p = pl.pallas_call(
            kernel,
            out_shape=jax.ShapeDtypeStruct((B, N, C_out_p), jnp.float32),
            grid_spec=pltpu.PrefetchScalarGridSpec(
                num_scalar_prefetch=0,
                grid=(B // batch_block,),
                in_specs=[
                    pl.BlockSpec((batch_block, N, C_in), lambda b: (b, 0, 0)),
                    pl.BlockSpec((batch_block, N, N), lambda b: (b, 0, 0)),
                    pl.BlockSpec((K + 1, C_in, C_out_p), lambda b: (0, 0, 0),
                                 pipeline_mode=pl.Buffered(1)),
                    pl.BlockSpec((1, C_out_p), lambda b: (0, 0),
                                 pipeline_mode=pl.Buffered(1)),
                ],
                out_specs=pl.BlockSpec((batch_block, N, C_out_p), lambda b: (b, 0, 0)),
            ),
            compiler_params=pltpu.CompilerParams(
                dimension_semantics=("parallel",),
                vmem_limit_bytes=budget,
            ),
        )(x, adj, w_stack, b_sum)
        # TODO(synk): for B == 1 on v7x this uses only one of the two TensorCores; a
        # core_map split of the row dimension (exchanging the small (N, C_in) carry via
        # VMEM_SHARED after each hop) would recover the second core.
    else:
        # ---- row-tiled path (adjacency streamed per hop) --------------------
        if row_tile is None:
            cands = [t for t in range(8, N + 1, 8) if N % t == 0]
            fitting = [t for t in cands
                       if _rowtiled_vmem_bytes(t, N, C_in, C_out_p, K, adj_bytes) <= budget]
            if fitting:
                big = [t for t in fitting if t <= 512]      # >=512-row tiles hit ~85% of HBM roofline
                row_tile = max(big) if big else min(fitting)
            else:
                row_tile = min(cands) if cands else N
        assert N % row_tile == 0 and row_tile % 8 == 0

        kernel = functools.partial(_rowtiled_kernel, K=K, tile_r=row_tile,
                                   matmul_dtype=matmul_dtype)
        out_p = pl.pallas_call(
            kernel,
            out_shape=jax.ShapeDtypeStruct((B, N, C_out_p), jnp.float32),
            grid_spec=pltpu.PrefetchScalarGridSpec(
                num_scalar_prefetch=0,
                grid=(B, K + 1, N // row_tile),
                in_specs=[
                    pl.BlockSpec((None, N, C_in), lambda b, k, r: (b, 0, 0)),
                    pl.BlockSpec((None, row_tile, N), lambda b, k, r: (b, r, 0)),
                    pl.BlockSpec((K + 1, C_in, C_out_p), lambda b, k, r: (0, 0, 0),
                                 pipeline_mode=pl.Buffered(1)),
                    pl.BlockSpec((1, C_out_p), lambda b, k, r: (0, 0),
                                 pipeline_mode=pl.Buffered(1)),
                ],
                out_specs=pl.BlockSpec((None, row_tile, C_out_p), lambda b, k, r: (b, r, 0)),
                scratch_shapes=[
                    pltpu.VMEM((N, 1), jnp.float32),          # D^-1/2
                    pltpu.VMEM((N, C_in), jnp.float32),       # Chebyshev carry slot 0
                    pltpu.VMEM((N, C_in), jnp.float32),       # Chebyshev carry slot 1
                    pltpu.VMEM((N, C_out_p), jnp.float32),    # projection accumulator
                ],
            ),
            compiler_params=pltpu.CompilerParams(
                dimension_semantics=("parallel", "arbitrary", "arbitrary"),
                vmem_limit_bytes=budget,
            ),
        )(x, adj, w_stack, b_sum)

    return out_p[..., :C_out] if C_out_p != C_out else out_p


# --------------------------------------------------------------------------- #
# Pure-JAX reference (mirrors the PyTorch dense-adjacency branch)
# --------------------------------------------------------------------------- #
def graph_propagation_ref(x, adj, weights, biases, *, K=3):
    B, N, _ = x.shape
    identity = jnp.eye(N, dtype=jnp.float32)[None].repeat(B, axis=0)
    degree = jnp.sum(adj, axis=-1)
    d_inv_sqrt = (degree + 1e-6) ** -0.5
    D = jax.vmap(jnp.diag)(d_inv_sqrt)
    lap = identity - jnp.einsum("bij,bjk,bkl->bil", D, adj, D)
    scaled = 2.0 * lap / 2.0 - identity

    tx_0 = x
    out = jnp.einsum("bni,io->bno", tx_0, weights[0]) + biases[0]
    tx_1 = jnp.einsum("bij,bjc->bic", scaled, x)
    out = out + jnp.einsum("bni,io->bno", tx_1, weights[1]) + biases[1]
    for k in range(2, K + 1):
        tx_k = 2.0 * jnp.einsum("bij,bjc->bic", scaled, tx_1) - tx_0
        out = out + jnp.einsum("bni,io->bno", tx_k, weights[k]) + biases[k]
        tx_0, tx_1 = tx_1, tx_k
    return jnp.maximum(out, 0.0)


if __name__ == "__main__":
    B, N, C_in, C_out, K = 2, 16, 4, 8, 3

    key = jax.random.PRNGKey(0)
    kx, kadj, kw, kb = jax.random.split(key, 4)

    x = jax.random.normal(kx, (B, N, C_in), dtype=jnp.float32)
    # non-negative symmetric-ish adjacency with self loops (no isolated nodes)
    raw = jax.random.uniform(kadj, (B, N, N), dtype=jnp.float32)
    adj = 0.5 * (raw + jnp.swapaxes(raw, 1, 2)) + jnp.eye(N, dtype=jnp.float32)[None]

    # Deterministic stand-ins for the nn.Linear parameters, stored pre-transposed
    # so the kernel computes y = x @ W + b.
    bound = 1.0 / np.sqrt(C_in)
    weights = jax.random.uniform(
        kw, (K + 1, C_in, C_out), minval=-bound, maxval=bound, dtype=jnp.float32)
    biases = jax.random.uniform(
        kb, (K + 1, C_out), minval=-bound, maxval=bound, dtype=jnp.float32)

    ref = graph_propagation_ref(x, adj, weights, biases, K=K)

    # 1) f32-operand resident path: exact-precision check against the reference.
    out_f32 = jax.block_until_ready(
        graph_propagation(x, adj, weights, biases, K=K, matmul_dtype=jnp.float32))
    np.testing.assert_allclose(np.asarray(out_f32), np.asarray(ref), rtol=1e-4, atol=1e-5)

    # 2) default bf16-operand path (bf16 adjacency stream / MXU operands, f32 carries):
    #    the Chebyshev recursion compounds bf16 operand rounding -> looser tolerance.
    out_bf16 = jax.block_until_ready(
        graph_propagation(x, adj, weights, biases, K=K))
    np.testing.assert_allclose(np.asarray(out_bf16), np.asarray(ref), rtol=5e-2, atol=5e-2)

    # 3) row-tiled (large-N) path, forced at a tiny tile to exercise the code path.
    out_tiled = jax.block_until_ready(
        graph_propagation(x, adj, weights, biases, K=K, matmul_dtype=jnp.float32,
                          force_row_tiled=True, row_tile=8))
    np.testing.assert_allclose(np.asarray(out_tiled), np.asarray(ref), rtol=1e-4, atol=1e-5)

    # TODO(synk): the sparse-adjacency (torch.sparse.mm) and list-of-adjacency branches of
    # the PyTorch module are not implemented; dense batched adjacency path only.
    print("KERNEL_OK")
</pallas_src>

<mosaic_0001>
module attributes {stable_mosaic.version = 11 : i64} {
  func.func @_resident_kernel(%arg0: i32, %arg1: memref<2x16x4xf32, #tpu.memory_space<vmem>>, %arg2: memref<2x16x16xf32, #tpu.memory_space<vmem>>, %arg3: memref<4x4x128xf32, #tpu.memory_space<vmem>>, %arg4: memref<1x128xf32, #tpu.memory_space<vmem>>, %arg5: memref<2x16x128xf32, #tpu.memory_space<vmem>>) attributes {dimension_semantics = [#tpu.dimension_semantics<parallel>], iteration_bounds = array<i64: 1>, scalar_prefetch = 0 : i64, scratch_operands = 0 : i64, tpu.core_type = #tpu.core_type<tc>, window_params = [{transform_indices = @transform_0, window_bounds = array<i64: 2, 16, 4>}, {transform_indices = @transform_1, window_bounds = array<i64: 2, 16, 16>}, {pipeline_mode = #tpu.pipeline_mode<synchronous>, transform_indices = @transform_2, window_bounds = array<i64: 4, 4, 128>}, {pipeline_mode = #tpu.pipeline_mode<synchronous>, transform_indices = @transform_3, window_bounds = array<i64: 1, 128>}, {transform_indices = @transform_4, window_bounds = array<i64: 2, 16, 128>}]} {
    %c0 = arith.constant 0 : index
    %c0_0 = arith.constant 0 : index
    %c0_1 = arith.constant 0 : index
    %0 = vector.load %arg3[%c0, %c0_0, %c0_1] : memref<4x4x128xf32, #tpu.memory_space<vmem>>, vector<1x4x128xf32>
    %1 = vector.shape_cast %0 : vector<1x4x128xf32> to vector<4x128xf32>
    %c1 = arith.constant 1 : index
    %c0_2 = arith.constant 0 : index
    %c0_3 = arith.constant 0 : index
    %2 = vector.load %arg3[%c1, %c0_2, %c0_3] : memref<4x4x128xf32, #tpu.memory_space<vmem>>, vector<1x4x128xf32>
    %3 = vector.shape_cast %2 : vector<1x4x128xf32> to vector<4x128xf32>
    %c2 = arith.constant 2 : index
    %c0_4 = arith.constant 0 : index
    %c0_5 = arith.constant 0 : index
    %4 = vector.load %arg3[%c2, %c0_4, %c0_5] : memref<4x4x128xf32, #tpu.memory_space<vmem>>, vector<1x4x128xf32>
    %5 = vector.shape_cast %4 : vector<1x4x128xf32> to vector<4x128xf32>
    %c3 = arith.constant 3 : index
    %c0_6 = arith.constant 0 : index
    %c0_7 = arith.constant 0 : index
    %6 = vector.load %arg3[%c3, %c0_6, %c0_7] : memref<4x4x128xf32, #tpu.memory_space<vmem>>, vector<1x4x128xf32>
    %7 = vector.shape_cast %6 : vector<1x4x128xf32> to vector<4x128xf32>
    %c0_8 = arith.constant 0 : index
    %c0_9 = arith.constant 0 : index
    %8 = vector.load %arg4[%c0_8, %c0_9] : memref<1x128xf32, #tpu.memory_space<vmem>>, vector<1x128xf32>
    %c0_10 = arith.constant 0 : index
    %c0_11 = arith.constant 0 : index
    %c0_12 = arith.constant 0 : index
    %9 = vector.load %arg1[%c0_10, %c0_11, %c0_12] : memref<2x16x4xf32, #tpu.memory_space<vmem>>, vector<1x16x4xf32>
    %10 = vector.shape_cast %9 : vector<1x16x4xf32> to vector<16x4xf32>
    %c0_13 = arith.constant 0 : index
    %c0_14 = arith.constant 0 : index
    %c0_15 = arith.constant 0 : index
    %11 = vector.load %arg2[%c0_13, %c0_14, %c0_15] : memref<2x16x16xf32, #tpu.memory_space<vmem>>, vector<1x16x16xf32>
    %12 = vector.shape_cast %11 : vector<1x16x16xf32> to vector<16x16xf32>
    %c0_16 = arith.constant 0 : index
    %c0_17 = arith.constant 0 : index
    %c0_18 = arith.constant 0 : index
    %13 = vector.load %arg2[%c0_16, %c0_17, %c0_18] : memref<2x16x16xf32, #tpu.memory_space<vmem>>, vector<1x16x16xf32>
    %14 = vector.shape_cast %13 : vector<1x16x16xf32> to vector<16x16xf32>
    %cst = arith.constant dense<0.000000e+00> : vector<16xf32>
    %15 = vector.multi_reduction <add>, %14, %cst [1] : vector<16x16xf32> to vector<16xf32>
    %16 = vector.shape_cast %15 : vector<16xf32> to vector<16x1xf32>
    %cst_19 = arith.constant 9.99999997E-7 : f32
    %17 = vector.broadcast %cst_19 : f32 to vector<16x1xf32>
    %18 = arith.addf %16, %17 : vector<16x1xf32>
    %19 = math.sqrt %18 : vector<16x1xf32>
    %cst_20 = arith.constant 1.000000e+00 : f32
    %20 = vector.broadcast %cst_20 : f32 to vector<16x1xf32>
    %21 = arith.divf %20, %19 : vector<16x1xf32>
    %cst_21 = arith.constant dense<0.000000e+00> : vector<16x128xf32>
    %22 = tpu.matmul %10, %1, %cst_21 {dimension_numbers = #tpu.dot_dimension_numbers<[1], [0], [0], [1], [0, 0, 1, 1], [], []>} : vector<16x4xf32>, vector<4x128xf32>, vector<16x128xf32> -> vector<16x128xf32>
    %cst_22 = arith.constant 0.000000e+00 : f32
    %23 = vector.broadcast %cst_22 : f32 to vector<16x1xf32>
    %24 = arith.subf %23, %21 : vector<16x1xf32>
    %25 = vector.broadcast %21 : vector<16x1xf32> to vector<16x4xf32>
    %26 = arith.mulf %25, %10 : vector<16x4xf32>
    %cst_23 = arith.constant dense<0.000000e+00> : vector<16x4xf32>
    %27 = tpu.matmul %12, %26, %cst_23 {dimension_numbers = #tpu.dot_dimension_numbers<[1], [0], [0], [1], [0, 0, 1, 1], [], []>} : vector<16x16xf32>, vector<16x4xf32>, vector<16x4xf32> -> vector<16x4xf32>
    %28 = vector.broadcast %24 : vector<16x1xf32> to vector<16x4xf32>
    %29 = arith.mulf %28, %27 : vector<16x4xf32>
    %cst_24 = arith.constant dense<0.000000e+00> : vector<16x128xf32>
    %30 = tpu.matmul %29, %3, %cst_24 {dimension_numbers = #tpu.dot_dimension_numbers<[1], [0], [0], [1], [0, 0, 1, 1], [], []>} : vector<16x4xf32>, vector<4x128xf32>, vector<16x128xf32> -> vector<16x128xf32>
    %31 = arith.addf %22, %30 : vector<16x128xf32>
    %cst_25 = arith.constant -2.000000e+00 : f32
    %32 = vector.broadcast %cst_25 : f32 to vector<16x1xf32>
    %33 = arith.mulf %32, %21 : vector<16x1xf32>
    %34 = vector.broadcast %21 : vector<16x1xf32> to vector<16x4xf32>
    %35 = arith.mulf %34, %29 : vector<16x4xf32>
    %cst_26 = arith.constant dense<0.000000e+00> : vector<16x4xf32>
    %36 = tpu.matmul %12, %35, %cst_26 {dimension_numbers = #tpu.dot_dimension_numbers<[1], [0], [0], [1], [0, 0, 1, 1], [], []>} : vector<16x16xf32>, vector<16x4xf32>, vector<16x4xf32> -> vector<16x4xf32>
    %37 = vector.broadcast %33 : vector<16x1xf32> to vector<16x4xf32>
    %38 = arith.mulf %37, %36 : vector<16x4xf32>
    %39 = arith.subf %38, %10 : vector<16x4xf32>
    %cst_27 = arith.constant dense<0.000000e+00> : vector<16x128xf32>
    %40 = tpu.matmul %39, %5, %cst_27 {dimension_numbers = #tpu.dot_dimension_numbers<[1], [0], [0], [1], [0, 0, 1, 1], [], []>} : vector<16x4xf32>, vector<4x128xf32>, vector<16x128xf32> -> vector<16x128xf32>
    %41 = arith.addf %31, %40 : vector<16x128xf32>
    %cst_28 = arith.constant -2.000000e+00 : f32
    %42 = vector.broadcast %cst_28 : f32 to vector<16x1xf32>
    %43 = arith.mulf %42, %21 : vector<16x1xf32>
    %44 = vector.broadcast %21 : vector<16x1xf32> to vector<16x4xf32>
    %45 = arith.mulf %44, %39 : vector<16x4xf32>
    %cst_29 = arith.constant dense<0.000000e+00> : vector<16x4xf32>
    %46 = tpu.matmul %12, %45, %cst_29 {dimension_numbers = #tpu.dot_dimension_numbers<[1], [0], [0], [1], [0, 0, 1, 1], [], []>} : vector<16x16xf32>, vector<16x4xf32>, vector<16x4xf32> -> vector<16x4xf32>
    %47 = vector.broadcast %43 : vector<16x1xf32> to vector<16x4xf32>
    %48 = arith.mulf %47, %46 : vector<16x4xf32>
    %49 = arith.subf %48, %29 : vector<16x4xf32>
    %cst_30 = arith.constant dense<0.000000e+00> : vector<16x128xf32>
    %50 = tpu.matmul %49, %7, %cst_30 {dimension_numbers = #tpu.dot_dimension_numbers<[1], [0], [0], [1], [0, 0, 1, 1], [], []>} : vector<16x4xf32>, vector<4x128xf32>, vector<16x128xf32> -> vector<16x128xf32>
    %51 = arith.addf %41, %50 : vector<16x128xf32>
    %52 = vector.broadcast %8 : vector<1x128xf32> to vector<16x128xf32>
    %53 = arith.addf %51, %52 : vector<16x128xf32>
    %cst_31 = arith.constant 0.000000e+00 : f32
    %54 = vector.broadcast %cst_31 : f32 to vector<16x128xf32>
    %55 = arith.maximumf %53, %54 : vector<16x128xf32>
    %c0_32 = arith.constant 0 : index
    %c0_33 = arith.constant 0 : index
    %c0_34 = arith.constant 0 : index
    %56 = vector.load %arg5[%c0_32, %c0_33, %c0_34] : memref<2x16x128xf32, #tpu.memory_space<vmem>>, vector<1x16x128xf32>
    %57 = vector.shape_cast %56 : vector<1x16x128xf32> to vector<16x128xf32>
    %58 = vector.shape_cast %55 : vector<16x128xf32> to vector<1x16x128xf32>
    tpu.vector_store %arg5[%c0_32, %c0_33, %c0_34], %58 {strides = array<i32>} : memref<2x16x128xf32, #tpu.memory_space<vmem>>, vector<1x16x128xf32>,
    %c1_35 = arith.constant 1 : index
    %c0_36 = arith.constant 0 : index
    %c0_37 = arith.constant 0 : index
    %59 = vector.load %arg1[%c1_35, %c0_36, %c0_37] : memref<2x16x4xf32, #tpu.memory_space<vmem>>, vector<1x16x4xf32>
    %60 = vector.shape_cast %59 : vector<1x16x4xf32> to vector<16x4xf32>
    %c1_38 = arith.constant 1 : index
    %c0_39 = arith.constant 0 : index
    %c0_40 = arith.constant 0 : index
    %61 = vector.load %arg2[%c1_38, %c0_39, %c0_40] : memref<2x16x16xf32, #tpu.memory_space<vmem>>, vector<1x16x16xf32>
    %62 = vector.shape_cast %61 : vector<1x16x16xf32> to vector<16x16xf32>
    %c1_41 = arith.constant 1 : index
    %c0_42 = arith.constant 0 : index
    %c0_43 = arith.constant 0 : index
    %63 = vector.load %arg2[%c1_41, %c0_42, %c0_43] : memref<2x16x16xf32, #tpu.memory_space<vmem>>, vector<1x16x16xf32>
    %64 = vector.shape_cast %63 : vector<1x16x16xf32> to vector<16x16xf32>
    %cst_44 = arith.constant dense<0.000000e+00> : vector<16xf32>
    %65 = vector.multi_reduction <add>, %64, %cst_44 [1] : vector<16x16xf32> to vector<16xf32>
    %66 = vector.shape_cast %65 : vector<16xf32> to vector<16x1xf32>
    %cst_45 = arith.constant 9.99999997E-7 : f32
    %67 = vector.broadcast %cst_45 : f32 to vector<16x1xf32>
    %68 = arith.addf %66, %67 : vector<16x1xf32>
    %69 = math.sqrt %68 : vector<16x1xf32>
    %cst_46 = arith.constant 1.000000e+00 : f32
    %70 = vector.broadcast %cst_46 : f32 to vector<16x1xf32>
    %71 = arith.divf %70, %69 : vector<16x1xf32>
    %cst_47 = arith.constant dense<0.000000e+00> : vector<16x128xf32>
    %72 = tpu.matmul %60, %1, %cst_47 {dimension_numbers = #tpu.dot_dimension_numbers<[1], [0], [0], [1], [0, 0, 1, 1], [], []>} : vector<16x4xf32>, vector<4x128xf32>, vector<16x128xf32> -> vector<16x128xf32>
    %cst_48 = arith.constant 0.000000e+00 : f32
    %73 = vector.broadcast %cst_48 : f32 to vector<16x1xf32>
    %74 = arith.subf %73, %71 : vector<16x1xf32>
    %75 = vector.broadcast %71 : vector<16x1xf32> to vector<16x4xf32>
    %76 = arith.mulf %75, %60 : vector<16x4xf32>
    %cst_49 = arith.constant dense<0.000000e+00> : vector<16x4xf32>
    %77 = tpu.matmul %62, %76, %cst_49 {dimension_numbers = #tpu.dot_dimension_numbers<[1], [0], [0], [1], [0, 0, 1, 1], [], []>} : vector<16x16xf32>, vector<16x4xf32>, vector<16x4xf32> -> vector<16x4xf32>
    %78 = vector.broadcast %74 : vector<16x1xf32> to vector<16x4xf32>
    %79 = arith.mulf %78, %77 : vector<16x4xf32>
    %cst_50 = arith.constant dense<0.000000e+00> : vector<16x128xf32>
    %80 = tpu.matmul %79, %3, %cst_50 {dimension_numbers = #tpu.dot_dimension_numbers<[1], [0], [0], [1], [0, 0, 1, 1], [], []>} : vector<16x4xf32>, vector<4x128xf32>, vector<16x128xf32> -> vector<16x128xf32>
    %81 = arith.addf %72, %80 : vector<16x128xf32>
    %cst_51 = arith.constant -2.000000e+00 : f32
    %82 = vector.broadcast %cst_51 : f32 to vector<16x1xf32>
    %83 = arith.mulf %82, %71 : vector<16x1xf32>
    %84 = vector.broadcast %71 : vector<16x1xf32> to vector<16x4xf32>
    %85 = arith.mulf %84, %79 : vector<16x4xf32>
    %cst_52 = arith.constant dense<0.000000e+00> : vector<16x4xf32>
    %86 = tpu.matmul %62, %85, %cst_52 {dimension_numbers = #tpu.dot_dimension_numbers<[1], [0], [0], [1], [0, 0, 1, 1], [], []>} : vector<16x16xf32>, vector<16x4xf32>, vector<16x4xf32> -> vector<16x4xf32>
    %87 = vector.broadcast %83 : vector<16x1xf32> to vector<16x4xf32>
    %88 = arith.mulf %87, %86 : vector<16x4xf32>
    %89 = arith.subf %88, %60 : vector<16x4xf32>
    %cst_53 = arith.constant dense<0.000000e+00> : vector<16x128xf32>
    %90 = tpu.matmul %89, %5, %cst_53 {dimension_numbers = #tpu.dot_dimension_numbers<[1], [0], [0], [1], [0, 0, 1, 1], [], []>} : vector<16x4xf32>, vector<4x128xf32>, vector<16x128xf32> -> vector<16x128xf32>
    %91 = arith.addf %81, %90 : vector<16x128xf32>
    %cst_54 = arith.constant -2.000000e+00 : f32
    %92 = vector.broadcast %cst_54 : f32 to vector<16x1xf32>
    %93 = arith.mulf %92, %71 : vector<16x1xf32>
    %94 = vector.broadcast %71 : vector<16x1xf32> to vector<16x4xf32>
    %95 = arith.mulf %94, %89 : vector<16x4xf32>
    %cst_55 = arith.constant dense<0.000000e+00> : vector<16x4xf32>
    %96 = tpu.matmul %62, %95, %cst_55 {dimension_numbers = #tpu.dot_dimension_numbers<[1], [0], [0], [1], [0, 0, 1, 1], [], []>} : vector<16x16xf32>, vector<16x4xf32>, vector<16x4xf32> -> vector<16x4xf32>
    %97 = vector.broadcast %93 : vector<16x1xf32> to vector<16x4xf32>
    %98 = arith.mulf %97, %96 : vector<16x4xf32>
    %99 = arith.subf %98, %79 : vector<16x4xf32>
    %cst_56 = arith.constant dense<0.000000e+00> : vector<16x128xf32>
    %100 = tpu.matmul %99, %7, %cst_56 {dimension_numbers = #tpu.dot_dimension_numbers<[1], [0], [0], [1], [0, 0, 1, 1], [], []>} : vector<16x4xf32>, vector<4x128xf32>, vector<16x128xf32> -> vector<16x128xf32>
    %101 = arith.addf %91, %100 : vector<16x128xf32>
    %102 = vector.broadcast %8 : vector<1x128xf32> to vector<16x128xf32>
    %103 = arith.addf %101, %102 : vector<16x128xf32>
    %cst_57 = arith.constant 0.000000e+00 : f32
    %104 = vector.broadcast %cst_57 : f32 to vector<16x128xf32>
    %105 = arith.maximumf %103, %104 : vector<16x128xf32>
    %c1_58 = arith.constant 1 : index
    %c0_59 = arith.constant 0 : index
    %c0_60 = arith.constant 0 : index
    %106 = vector.load %arg5[%c1_58, %c0_59, %c0_60] : memref<2x16x128xf32, #tpu.memory_space<vmem>>, vector<1x16x128xf32>
    %107 = vector.shape_cast %106 : vector<1x16x128xf32> to vector<16x128xf32>
    %108 = vector.shape_cast %105 : vector<16x128xf32> to vector<1x16x128xf32>
    tpu.vector_store %arg5[%c1_58, %c0_59, %c0_60], %108 {strides = array<i32>} : memref<2x16x128xf32, #tpu.memory_space<vmem>>, vector<1x16x128xf32>,
    return
  }
  func.func @transform_0(%arg0: i32) -> (i32, i32, i32) {
    %c0_i32 = arith.constant 0 : i32
    %c0_i32_0 = arith.constant 0 : i32
    %c0_i32_1 = arith.constant 0 : i32
    return %arg0, %c0_i32, %c0_i32_0 : i32, i32, i32
  }
  func.func @transform_1(%arg0: i32) -> (i32, i32, i32) {
    %c0_i32 = arith.constant 0 : i32
    %c0_i32_0 = arith.constant 0 : i32
    %c0_i32_1 = arith.constant 0 : i32
    return %arg0, %c0_i32, %c0_i32_0 : i32, i32, i32
  }
  func.func @transform_2(%arg0: i32) -> (i32, i32, i32) {
    %c0_i32 = arith.constant 0 : i32
    %c0_i32_0 = arith.constant 0 : i32
    %c0_i32_1 = arith.constant 0 : i32
    %c0_i32_2 = arith.constant 0 : i32
    return %c0_i32, %c0_i32_0, %c0_i32_1 : i32, i32, i32
  }
  func.func @transform_3(%arg0: i32) -> (i32, i32) {
    %c0_i32 = arith.constant 0 : i32
    %c0_i32_0 = arith.constant 0 : i32
    %c0_i32_1 = arith.constant 0 : i32
    return %c0_i32, %c0_i32_0 : i32, i32
  }
  func.func @transform_4(%arg0: i32) -> (i32, i32, i32) {
    %c0_i32 = arith.constant 0 : i32
    %c0_i32_0 = arith.constant 0 : i32
    %c0_i32_1 = arith.constant 0 : i32
    return %arg0, %c0_i32, %c0_i32_0 : i32, i32, i32
  }
}

</mosaic_0001>

<llo_original>
// kernel: tpu_custom_call.1
$region0: #{tpu_custom_call.1}
  #allocation0 [shape = 'u32[]', space=smem, size = 0x4, offset = 0x4, fixed_abs, tag = 'smem constant byte address 0x4 - core index']
  #allocation1 [shape = 'u32[144,128]{1,0:T(1,128)}', space=vmem, size = 0x12000, scoped, tag = 'internal scratch']
  %s0 = inlined_call_operand.vmem [shape: f32[2,16,4], index: 0, kind: input, shape index: {}]
  %s1 = inlined_call_operand.vmem [shape: f32[2,16,16], index: 1, kind: input, shape index: {}]
  %s2 = inlined_call_operand.hbm [shape: f32[4,4,128], index: 2, kind: input, shape index: {}]
  %s3 = inlined_call_operand.vmem [shape: f32[1,128], index: 3, kind: input, shape index: {}]
  %s4 = inlined_call_operand.hbm [shape: f32[2,16,128], index: 4, kind: output, shape index: {}]
  %s5 = sld [smem:[#allocation0]]
  $region30: #{tpu_custom_call.1} parent=0
    _
  %s7 = ssub.s32 1, %s5
  %s8 = scalar_select 0, %s7, %s5
  $region1: #{tpu_custom_call.1} parent=0
    #allocation2 [shape = 'u8[8192]{0}', space=vmem, size = 0x2000, scoped, tag = 'input window, operand 2, single buffered']
    #allocation3 [shape = 's32[1]{0}', space=sflag, size = 0x4, scoped, tag = 'scoped memory for tpu_custom_call.1']
    #allocation4 [shape = 's32[1]{0}', space=sflag, size = 0x4, scoped, tag = 'scoped memory for tpu_custom_call.1']
    #allocation5 [shape = 'u8[16384]{0}', space=vmem, size = 0x4000, scoped, tag = 'output window, operand 0, single buffered']
    %9 = vsyncpa [#allocation3], 0
    %10 = vsyncpa [#allocation4], 0
    // Predicated region
    $region2: #{tpu_custom_call.1} parent=1 // pred_check
      _
    $region3: #{tpu_custom_call.1} parent=1 // pred_check_branch
      %12 = sbr.rel (0) target = $region5
    $region4: #{tpu_custom_call.1} parent=1 // pred_region
      _
    $region5: #{tpu_custom_call.1} parent=1 // pred_fallthru
      _
    // Predicated region
    $region6: #{tpu_custom_call.1} parent=1 // pred_check
      _
    $region7: #{tpu_custom_call.1} parent=1 // pred_check_branch
      %14 = sbr.rel (0) target = $region9
    $region8: #{tpu_custom_call.1} parent=1 // pred_region
      _
    $region9: #{tpu_custom_call.1} parent=1 // pred_fallthru
      _
    // Predicated region
    $region10: #{tpu_custom_call.1} parent=1 // pred_check
      _
    $region11: #{tpu_custom_call.1} parent=1 // pred_check_branch
      %16 = sbr.rel (0) target = $region13
    $region12: #{tpu_custom_call.1} parent=1 // pred_region
      %s18 = ssub.s32 256, 256
      %19 = vsyncadd [#allocation3], %s18
      %s20 = sshll.u32 [#allocation2], 4
      %s21 = int_to_ptr.vmem [resolvable:$true] %s20
      %26 = dma.hbm_to_vmem [thread:$0]  %s2, 256, %s21, [#allocation3], 64, 64, 4
    $region13: #{tpu_custom_call.1} parent=1 // pred_fallthru
      _
    // Predicated region
    $region14: #{tpu_custom_call.1} parent=1 // pred_check
      _
    $region15: #{tpu_custom_call.1} parent=1 // pred_check_branch
      %28 = sbr.rel (0) target = $region17
    $region16: #{tpu_custom_call.1} parent=1 // pred_region
      _
    $region17: #{tpu_custom_call.1} parent=1 // pred_fallthru
      _
    // Predicated region
    $region18: #{tpu_custom_call.1} parent=1 // pred_check
      _
    $region19: #{tpu_custom_call.1} parent=1 // pred_check_branch
      %30 = sbr.rel (0) target = $region21
    $region20: #{tpu_custom_call.1} parent=1 // pred_region
      %31 = dma.done [#allocation3], 256
    $region21: #{tpu_custom_call.1} parent=1 // pred_fallthru
      _
    %v32 = vld [vmem:[#allocation2] sm:$0xf]
    %s33 = scalar_lea.vmem [#allocation2], 4
    %v34 = vld [vmem:[%s33] sm:$0xf]
    %s35 = scalar_lea.vmem [#allocation2], 8
    %v36 = vld [vmem:[%s35] sm:$0xf]
    %s37 = scalar_lea.vmem [#allocation2], 12
    %v38 = vld [vmem:[%s37] sm:$0xf]
    %v39 = vld [vmem:[%s3] sm:$0x1]
    %v40 = vld [vmem:[%s0] sm:$0xff]
    %v41 = vld [vmem:[%s0 + $0x8] sm:$0xff]
    %v42 = vld [vmem:[%s1] sm:$0xff]
    %v43 = vld [vmem:[%s1 + $0x8] sm:$0xff]
    %vm44 = vcmask 130048
    %v45 = vsel %vm44, %v42, 0.0
    %46 = vadd.xlane.f32.xlu0 %v45
    %v47 = vpop.xlane.xlu0 %46
    %v48 = vsel %vm44, %v43, 0.0
    %49 = vadd.xlane.f32.xlu0 %v48
    %v50 = vpop.xlane.xlu0 %49
    %v51 = vadd.f32 %v47, 1e-06
    %v52 = vadd.f32 %v50, 1e-06
    %v53 = vrsqrt.pop %v51
    %v54 = vmul.f32 %v51, %v53
    %vm55 = vcmp.eq.f32.partialorder %v51, inf
    %v56 = vsel %vm55, %v51, %v54
    %vm57 = vcmp.eq.f32.partialorder %v51, 0.0
    %v58 = vand.u32 %v51, 2147483648
    %v59 = vsel %vm57, %v58, %v56
    %v60 = vrsqrt.pop %v52
    %v61 = vmul.f32 %v52, %v60
    %vm62 = vcmp.eq.f32.partialorder %v52, inf
    %v63 = vsel %vm62, %v52, %v61
    %vm64 = vcmp.eq.f32.partialorder %v52, 0.0
    %v65 = vand.u32 %v52, 2147483648
    %v66 = vsel %vm64, %v65, %v63
    %v67 = vrcp.pop %v59
    %v68 = vmul.f32 1.0, %v67
    %v69 = vrcp.pop %v66
    %v70 = vmul.f32 1.0, %v69
    %v71 = vsub.f32 0.0, %v68
    %v72 = vsub.f32 0.0, %v70
    %v73 = vmul.f32 %v68, %v40
    %v74 = vmul.f32 %v70, %v41
    %v76 = vsel %vm44, %v42, 0
    %v79 = vsel %vm44, %v43, 0
    %81 = vmatprep.subr.mxu0 0.0
    %82 = vmatpush1.msra.mxu0 %v73
    %83 = vmatprep.subr.mxu0 0.0
    %84 = vmatpush1.msra.mxu0 %v74
    %85 = vmatprep.subr.mxu0 0.0
    %86 = vmatpush1.msra.mxu0 0.0
    %87 = vmatprep.subr.mxu0 0.0
    %88 = vmatpush1.msra.mxu0 0.0
    %89 = vmatprep.subr.mxu0 0.0
    %90 = vmatpush1.msra.mxu0 0.0
    %91 = vmatprep.subr.mxu0 0.0
    %92 = vmatpush1.msra.mxu0 0.0
    %93 = vmatprep.subr.mxu0 0.0
    %94 = vmatpush1.msra.mxu0 0.0
    %95 = vmatprep.subr.mxu0 0.0
    %96 = vmatpush1.msra.mxu0 0.0
    %97 = vmatprep.subr.mxu0 0.0
    %98 = vmatpush1.msra.mxu0 0.0
    %99 = vmatprep.subr.mxu0 0.0
    %100 = vmatpush1.msra.mxu0 0.0
    %101 = vmatprep.subr.mxu0 0.0
    %102 = vmatpush1.msra.mxu0 0.0
    %103 = vmatprep.subr.mxu0 0.0
    %104 = vmatpush1.msra.mxu0 0.0
    %105 = vmatprep.subr.mxu0 0.0
    %106 = vmatpush1.msra.mxu0 0.0
    %107 = vmatprep.subr.mxu0 0.0
    %108 = vmatpush1.msra.mxu0 0.0
    %109 = vmatprep.subr.mxu0 0.0
    %110 = vmatpush1.msra.mxu0 0.0
    %111 = vmatprep.subr.mxu0 0.0
    %112 = vmatpush1.msra.mxu0 0.0
    %113 = vmatprep.subr.mxu0 0.0
    %114 = vmatpush1.msra.mxu0 0.0
    %115 = vmatprep.subr.mxu0 0.0
    %116 = vmatpush1.msra.mxu0 0.0
    %117 = vmatprep.subr.mxu0 0.0
    %118 = vmatpush1.msra.mxu0 0.0
    %119 = vmatprep.subr.mxu0 0.0
    %120 = vmatpush1.msra.mxu0 0.0
    %121 = vmatprep.subr.mxu0 0.0
    %122 = vmatpush1.msra.mxu0 0.0
    %123 = vmatprep.subr.mxu0 0.0
    %124 = vmatpush1.msra.mxu0 0.0
    %125 = vmatprep.subr.mxu0 0.0
    %126 = vmatpush1.msra.mxu0 0.0
    %127 = vmatprep.subr.mxu0 0.0
    %128 = vmatpush1.msra.mxu0 0.0
    %129 = vmatprep.subr.mxu0 0.0
    %130 = vmatpush1.msra.mxu0 0.0
    %131 = vmatprep.subr.mxu0 0.0
    %132 = vmatpush1.msra.mxu0 0.0
    %133 = vmatprep.subr.mxu0 0.0
    %134 = vmatpush1.msra.mxu0 0.0
    %135 = vmatprep.subr.mxu0 0.0
    %136 = vmatpush1.msra.mxu0 0.0
    %137 = vmatprep.subr.mxu0 0.0
    %138 = vmatpush1.msra.mxu0 0.0
    %139 = vmatprep.subr.mxu0 0.0
    %140 = vmatpush1.msra.mxu0 0.0
    %141 = vmatprep.subr.mxu0 0.0
    %142 = vmatpush1.msra.mxu0 0.0
    %143 = vmatprep.subr.mxu0 0.0
    %144 = vmatpush1.msra.mxu0 0.0
    %145 = vmatprep.mubr.f32.mxu0 0.0
    %146 = vmatmul.mubr.f32.gmra.mrb[0].mxu0 %v76
    %v147 = vpop.f32.mrb[0].mxu0
    %v148 = vadd.f32 0.0, %v147
    %v149 = vpop.f32.mrb[0].mxu0
    %150 = vmatprep.mubr.f32.mxu0 0.0
    %151 = vmatmul.mubr.f32.gmra.mrb[0].mxu0 %v79
    %v152 = vpop.f32.mrb[0].mxu0
    %v153 = vadd.f32 0.0, %v152
    %v154 = vpop.f32.mrb[0].mxu0
    %155 = vdwg.mxu0
    %v156 = vmul.f32 %v71, %v148
    %v157 = vmul.f32 %v72, %v153
    %vm158 = vcmask 31744
    %v160 = vsel %vm158, %v156, 0
    %v163 = vsel %vm158, %v157, 0
    %vm165 = vcmask 1043456
    %v167 = vsel %vm165, %v34, 0
    %169 = vmatprep.subr.mxu0 0.0
    %170 = vmatpush1.msra.mxu0 %v167
    %171 = vmatprep.subr.mxu0 0.0
    %172 = vmatpush1.msra.mxu0 0.0
    %173 = vmatprep.subr.mxu0 0.0
    %174 = vmatpush1.msra.mxu0 0.0
    %175 = vmatprep.subr.mxu0 0.0
    %176 = vmatpush1.msra.mxu0 0.0
    %177 = vmatprep.subr.mxu0 0.0
    %178 = vmatpush1.msra.mxu0 0.0
    %179 = vmatprep.subr.mxu0 0.0
    %180 = vmatpush1.msra.mxu0 0.0
    %181 = vmatprep.subr.mxu0 0.0
    %182 = vmatpush1.msra.mxu0 0.0
    %183 = vmatprep.subr.mxu0 0.0
    %184 = vmatpush1.msra.mxu0 0.0
    %185 = vmatprep.subr.mxu0 0.0
    %186 = vmatpush1.msra.mxu0 0.0
    %187 = vmatprep.subr.mxu0 0.0
    %188 = vmatpush1.msra.mxu0 0.0
    %189 = vmatprep.subr.mxu0 0.0
    %190 = vmatpush1.msra.mxu0 0.0
    %191 = vmatprep.subr.mxu0 0.0
    %192 = vmatpush1.msra.mxu0 0.0
    %193 = vmatprep.subr.mxu0 0.0
    %194 = vmatpush1.msra.mxu0 0.0
    %195 = vmatprep.subr.mxu0 0.0
    %196 = vmatpush1.msra.mxu0 0.0
    %197 = vmatprep.subr.mxu0 0.0
    %198 = vmatpush1.msra.mxu0 0.0
    %199 = vmatprep.subr.mxu0 0.0
    %200 = vmatpush1.msra.mxu0 0.0
    %201 = vmatprep.subr.mxu0 0.0
    %202 = vmatpush1.msra.mxu0 0.0
    %203 = vmatprep.subr.mxu0 0.0
    %204 = vmatpush1.msra.mxu0 0.0
    %205 = vmatprep.subr.mxu0 0.0
    %206 = vmatpush1.msra.mxu0 0.0
    %207 = vmatprep.subr.mxu0 0.0
    %208 = vmatpush1.msra.mxu0 0.0
    %209 = vmatprep.subr.mxu0 0.0
    %210 = vmatpush1.msra.mxu0 0.0
    %211 = vmatprep.subr.mxu0 0.0
    %212 = vmatpush1.msra.mxu0 0.0
    %213 = vmatprep.subr.mxu0 0.0
    %214 = vmatpush1.msra.mxu0 0.0
    %215 = vmatprep.subr.mxu0 0.0
    %216 = vmatpush1.msra.mxu0 0.0
    %217 = vmatprep.subr.mxu0 0.0
    %218 = vmatpush1.msra.mxu0 0.0
    %219 = vmatprep.subr.mxu0 0.0
    %220 = vmatpush1.msra.mxu0 0.0
    %221 = vmatprep.subr.mxu0 0.0
    %222 = vmatpush1.msra.mxu0 0.0
    %223 = vmatprep.subr.mxu0 0.0
    %224 = vmatpush1.msra.mxu0 0.0
    %225 = vmatprep.subr.mxu0 0.0
    %226 = vmatpush1.msra.mxu0 0.0
    %227 = vmatprep.subr.mxu0 0.0
    %228 = vmatpush1.msra.mxu0 0.0
    %229 = vmatprep.subr.mxu0 0.0
    %230 = vmatpush1.msra.mxu0 0.0
    %231 = vmatprep.subr.mxu0 0.0
    %232 = vmatpush1.msra.mxu0 0.0
    %233 = vmatprep.mubr.f32.mxu0 0.0
    %234 = vmatmul.mubr.f32.gmra.mrb[0].mxu0 %v160
    %v235 = vpop.f32.mrb[0].mxu0
    %v236 = vadd.f32 0.0, %v235
    %v237 = vpop.f32.mrb[0].mxu0
    %238 = vmatprep.mubr.f32.mxu0 0.0
    %239 = vmatmul.mubr.f32.gmra.mrb[0].mxu0 %v163
    %v240 = vpop.f32.mrb[0].mxu0
    %v241 = vadd.f32 0.0, %v240
    %v242 = vpop.f32.mrb[0].mxu0
    %243 = vdwg.mxu0
    %v245 = vsel %vm158, %v40, 0
    %v248 = vsel %vm158, %v41, 0
    %v251 = vsel %vm165, %v32, 0
    %253 = vmatprep.subr.mxu0 0.0
    %254 = vmatpush1.msra.mxu0 %v251
    %255 = vmatprep.subr.mxu0 0.0
    %256 = vmatpush1.msra.mxu0 0.0
    %257 = vmatprep.subr.mxu0 0.0
    %258 = vmatpush1.msra.mxu0 0.0
    %259 = vmatprep.subr.mxu0 0.0
    %260 = vmatpush1.msra.mxu0 0.0
    %261 = vmatprep.subr.mxu0 0.0
    %262 = vmatpush1.msra.mxu0 0.0
    %263 = vmatprep.subr.mxu0 0.0
    %264 = vmatpush1.msra.mxu0 0.0
    %265 = vmatprep.subr.mxu0 0.0
    %266 = vmatpush1.msra.mxu0 0.0
    %267 = vmatprep.subr.mxu0 0.0
    %268 = vmatpush1.msra.mxu0 0.0
    %269 = vmatprep.subr.mxu0 0.0
    %270 = vmatpush1.msra.mxu0 0.0
    %271 = vmatprep.subr.mxu0 0.0
    %272 = vmatpush1.msra.mxu0 0.0
    %273 = vmatprep.subr.mxu0 0.0
    %274 = vmatpush1.msra.mxu0 0.0
    %275 = vmatprep.subr.mxu0 0.0
    %276 = vmatpush1.msra.mxu0 0.0
    %277 = vmatprep.subr.mxu0 0.0
    %278 = vmatpush1.msra.mxu0 0.0
    %279 = vmatprep.subr.mxu0 0.0
    %280 = vmatpush1.msra.mxu0 0.0
    %281 = vmatprep.subr.mxu0 0.0
    %282 = vmatpush1.msra.mxu0 0.0
    %283 = vmatprep.subr.mxu0 0.0
    %284 = vmatpush1.msra.mxu0 0.0
    %285 = vmatprep.subr.mxu0 0.0
    %286 = vmatpush1.msra.mxu0 0.0
    %287 = vmatprep.subr.mxu0 0.0
    %288 = vmatpush1.msra.mxu0 0.0
    %289 = vmatprep.subr.mxu0 0.0
    %290 = vmatpush1.msra.mxu0 0.0
    %291 = vmatprep.subr.mxu0 0.0
    %292 = vmatpush1.msra.mxu0 0.0
    %293 = vmatprep.subr.mxu0 0.0
    %294 = vmatpush1.msra.mxu0 0.0
    %295 = vmatprep.subr.mxu0 0.0
    %296 = vmatpush1.msra.mxu0 0.0
    %297 = vmatprep.subr.mxu0 0.0
    %298 = vmatpush1.msra.mxu0 0.0
    %299 = vmatprep.subr.mxu0 0.0
    %300 = vmatpush1.msra.mxu0 0.0
    %301 = vmatprep.subr.mxu0 0.0
    %302 = vmatpush1.msra.mxu0 0.0
    %303 = vmatprep.subr.mxu0 0.0
    %304 = vmatpush1.msra.mxu0 0.0
    %305 = vmatprep.subr.mxu0 0.0
    %306 = vmatpush1.msra.mxu0 0.0
    %307 = vmatprep.subr.mxu0 0.0
    %308 = vmatpush1.msra.mxu0 0.0
    %309 = vmatprep.subr.mxu0 0.0
    %310 = vmatpush1.msra.mxu0 0.0
    %311 = vmatprep.subr.mxu0 0.0
    %312 = vmatpush1.msra.mxu0 0.0
    %313 = vmatprep.subr.mxu0 0.0
    %314 = vmatpush1.msra.mxu0 0.0
    %315 = vmatprep.subr.mxu0 0.0
    %316 = vmatpush1.msra.mxu0 0.0
    %317 = vmatprep.mubr.f32.mxu0 0.0
    %318 = vmatmul.mubr.f32.gmra.mrb[0].mxu0 %v245
    %v319 = vpop.f32.mrb[0].mxu0
    %v320 = vadd.f32 %v236, %v319
    %v321 = vpop.f32.mrb[0].mxu0
    %322 = vmatprep.mubr.f32.mxu0 0.0
    %323 = vmatmul.mubr.f32.gmra.mrb[0].mxu0 %v248
    %v324 = vpop.f32.mrb[0].mxu0
    %v325 = vadd.f32 %v241, %v324
    %v326 = vpop.f32.mrb[0].mxu0
    %327 = vdwg.mxu0
    %v328 = vmul.f32 %v68, -2.0
    %v329 = vmul.f32 %v70, -2.0
    %v330 = vmul.f32 %v68, %v156
    %v331 = vmul.f32 %v70, %v157
    %332 = vmatprep.subr.mxu0 0.0
    %333 = vmatpush1.msra.mxu0 %v330
    %334 = vmatprep.subr.mxu0 0.0
    %335 = vmatpush1.msra.mxu0 %v331
    %336 = vmatprep.subr.mxu0 0.0
    %337 = vmatpush1.msra.mxu0 0.0
    %338 = vmatprep.subr.mxu0 0.0
    %339 = vmatpush1.msra.mxu0 0.0
    %340 = vmatprep.subr.mxu0 0.0
    %341 = vmatpush1.msra.mxu0 0.0
    %342 = vmatprep.subr.mxu0 0.0
    %343 = vmatpush1.msra.mxu0 0.0
    %344 = vmatprep.subr.mxu0 0.0
    %345 = vmatpush1.msra.mxu0 0.0
    %346 = vmatprep.subr.mxu0 0.0
    %347 = vmatpush1.msra.mxu0 0.0
    %348 = vmatprep.subr.mxu0 0.0
    %349 = vmatpush1.msra.mxu0 0.0
    %350 = vmatprep.subr.mxu0 0.0
    %351 = vmatpush1.msra.mxu0 0.0
    %352 = vmatprep.subr.mxu0 0.0
    %353 = vmatpush1.msra.mxu0 0.0
    %354 = vmatprep.subr.mxu0 0.0
    %355 = vmatpush1.msra.mxu0 0.0
    %356 = vmatprep.subr.mxu0 0.0
    %357 = vmatpush1.msra.mxu0 0.0
    %358 = vmatprep.subr.mxu0 0.0
    %359 = vmatpush1.msra.mxu0 0.0
    %360 = vmatprep.subr.mxu0 0.0
    %361 = vmatpush1.msra.mxu0 0.0
    %362 = vmatprep.subr.mxu0 0.0
    %363 = vmatpush1.msra.mxu0 0.0
    %364 = vmatprep.subr.mxu0 0.0
    %365 = vmatpush1.msra.mxu0 0.0
    %366 = vmatprep.subr.mxu0 0.0
    %367 = vmatpush1.msra.mxu0 0.0
    %368 = vmatprep.subr.mxu0 0.0
    %369 = vmatpush1.msra.mxu0 0.0
    %370 = vmatprep.subr.mxu0 0.0
    %371 = vmatpush1.msra.mxu0 0.0
    %372 = vmatprep.subr.mxu0 0.0
    %373 = vmatpush1.msra.mxu0 0.0
    %374 = vmatprep.subr.mxu0 0.0
    %375 = vmatpush1.msra.mxu0 0.0
    %376 = vmatprep.subr.mxu0 0.0
    %377 = vmatpush1.msra.mxu0 0.0
    %378 = vmatprep.subr.mxu0 0.0
    %379 = vmatpush1.msra.mxu0 0.0
    %380 = vmatprep.subr.mxu0 0.0
    %381 = vmatpush1.msra.mxu0 0.0
    %382 = vmatprep.subr.mxu0 0.0
    %383 = vmatpush1.msra.mxu0 0.0
    %384 = vmatprep.subr.mxu0 0.0
    %385 = vmatpush1.msra.mxu0 0.0
    %386 = vmatprep.subr.mxu0 0.0
    %387 = vmatpush1.msra.mxu0 0.0
    %388 = vmatprep.subr.mxu0 0.0
    %389 = vmatpush1.msra.mxu0 0.0
    %390 = vmatprep.subr.mxu0 0.0
    %391 = vmatpush1.msra.mxu0 0.0
    %392 = vmatprep.subr.mxu0 0.0
    %393 = vmatpush1.msra.mxu0 0.0
    %394 = vmatprep.subr.mxu0 0.0
    %395 = vmatpush1.msra.mxu0 0.0
    %396 = vmatprep.mubr.f32.mxu0 0.0
    %397 = vmatmul.mubr.f32.gmra.mrb[0].mxu0 %v76
    %v398 = vpop.f32.mrb[0].mxu0
    %v399 = vadd.f32 0.0, %v398
    %v400 = vpop.f32.mrb[0].mxu0
    %401 = vmatprep.mubr.f32.mxu0 0.0
    %402 = vmatmul.mubr.f32.gmra.mrb[0].mxu0 %v79
    %v403 = vpop.f32.mrb[0].mxu0
    %v404 = vadd.f32 0.0, %v403
    %v405 = vpop.f32.mrb[0].mxu0
    %406 = vdwg.mxu0
    %v407 = vmul.f32 %v328, %v399
    %v408 = vmul.f32 %v329, %v404
    %v409 = vsub.f32 %v407, %v40
    %v410 = vsub.f32 %v408, %v41
    %v412 = vsel %vm158, %v409, 0
    %v415 = vsel %vm158, %v410, 0
    %v418 = vsel %vm165, %v36, 0
    %420 = vmatprep.subr.mxu0 0.0
    %421 = vmatpush1.msra.mxu0 %v418
    %422 = vmatprep.subr.mxu0 0.0
    %423 = vmatpush1.msra.mxu0 0.0
    %424 = vmatprep.subr.mxu0 0.0
    %425 = vmatpush1.msra.mxu0 0.0
    %426 = vmatprep.subr.mxu0 0.0
    %427 = vmatpush1.msra.mxu0 0.0
    %428 = vmatprep.subr.mxu0 0.0
    %429 = vmatpush1.msra.mxu0 0.0
    %430 = vmatprep.subr.mxu0 0.0
    %431 = vmatpush1.msra.mxu0 0.0
    %432 = vmatprep.subr.mxu0 0.0
    %433 = vmatpush1.msra.mxu0 0.0
    %434 = vmatprep.subr.mxu0 0.0
    %435 = vmatpush1.msra.mxu0 0.0
    %436 = vmatprep.subr.mxu0 0.0
    %437 = vmatpush1.msra.mxu0 0.0
    %438 = vmatprep.subr.mxu0 0.0
    %439 = vmatpush1.msra.mxu0 0.0
    %440 = vmatprep.subr.mxu0 0.0
    %441 = vmatpush1.msra.mxu0 0.0
    %442 = vmatprep.subr.mxu0 0.0
    %443 = vmatpush1.msra.mxu0 0.0
    %444 = vmatprep.subr.mxu0 0.0
    %445 = vmatpush1.msra.mxu0 0.0
    %446 = vmatprep.subr.mxu0 0.0
    %447 = vmatpush1.msra.mxu0 0.0
    %448 = vmatprep.subr.mxu0 0.0
    %449 = vmatpush1.msra.mxu0 0.0
    %450 = vmatprep.subr.mxu0 0.0
    %451 = vmatpush1.msra.mxu0 0.0
    %452 = vmatprep.subr.mxu0 0.0
    %453 = vmatpush1.msra.mxu0 0.0
    %454 = vmatprep.subr.mxu0 0.0
    %455 = vmatpush1.msra.mxu0 0.0
    %456 = vmatprep.subr.mxu0 0.0
    %457 = vmatpush1.msra.mxu0 0.0
    %458 = vmatprep.subr.mxu0 0.0
    %459 = vmatpush1.msra.mxu0 0.0
    %460 = vmatprep.subr.mxu0 0.0
    %461 = vmatpush1.msra.mxu0 0.0
    %462 = vmatprep.subr.mxu0 0.0
    %463 = vmatpush1.msra.mxu0 0.0
    %464 = vmatprep.subr.mxu0 0.0
    %465 = vmatpush1.msra.mxu0 0.0
    %466 = vmatprep.subr.mxu0 0.0
    %467 = vmatpush1.msra.mxu0 0.0
    %468 = vmatprep.subr.mxu0 0.0
    %469 = vmatpush1.msra.mxu0 0.0
    %470 = vmatprep.subr.mxu0 0.0
    %471 = vmatpush1.msra.mxu0 0.0
    %472 = vmatprep.subr.mxu0 0.0
    %473 = vmatpush1.msra.mxu0 0.0
    %474 = vmatprep.subr.mxu0 0.0
    %475 = vmatpush1.msra.mxu0 0.0
    %476 = vmatprep.subr.mxu0 0.0
    %477 = vmatpush1.msra.mxu0 0.0
    %478 = vmatprep.subr.mxu0 0.0
    %479 = vmatpush1.msra.mxu0 0.0
    %480 = vmatprep.subr.mxu0 0.0
    %481 = vmatpush1.msra.mxu0 0.0
    %482 = vmatprep.subr.mxu0 0.0
    %483 = vmatpush1.msra.mxu0 0.0
    %484 = vmatprep.mubr.f32.mxu0 0.0
    %485 = vmatmul.mubr.f32.gmra.mrb[0].mxu0 %v412
    %v486 = vpop.f32.mrb[0].mxu0
    %v487 = vadd.f32 0.0, %v486
    %v488 = vpop.f32.mrb[0].mxu0
    %489 = vmatprep.mubr.f32.mxu0 0.0
    %490 = vmatmul.mubr.f32.gmra.mrb[0].mxu0 %v415
    %v491 = vpop.f32.mrb[0].mxu0
    %v492 = vadd.f32 0.0, %v491
    %v493 = vpop.f32.mrb[0].mxu0
    %494 = vdwg.mxu0
    %v495 = vadd.f32 %v320, %v487
    %v496 = vadd.f32 %v325, %v492
    %v497 = vmul.f32 %v68, %v409
    %v498 = vmul.f32 %v70, %v410
    %499 = vmatprep.subr.mxu0 0.0
    %500 = vmatpush1.msra.mxu0 %v497
    %501 = vmatprep.subr.mxu0 0.0
    %502 = vmatpush1.msra.mxu0 %v498
    %503 = vmatprep.subr.mxu0 0.0
    %504 = vmatpush1.msra.mxu0 0.0
    %505 = vmatprep.subr.mxu0 0.0
    %506 = vmatpush1.msra.mxu0 0.0
    %507 = vmatprep.subr.mxu0 0.0
    %508 = vmatpush1.msra.mxu0 0.0
    %509 = vmatprep.subr.mxu0 0.0
    %510 = vmatpush1.msra.mxu0 0.0
    %511 = vmatprep.subr.mxu0 0.0
    %512 = vmatpush1.msra.mxu0 0.0
    %513 = vmatprep.subr.mxu0 0.0
    %514 = vmatpush1.msra.mxu0 0.0
    %515 = vmatprep.subr.mxu0 0.0
    %516 = vmatpush1.msra.mxu0 0.0
    %517 = vmatprep.subr.mxu0 0.0
    %518 = vmatpush1.msra.mxu0 0.0
    %519 = vmatprep.subr.mxu0 0.0
    %520 = vmatpush1.msra.mxu0 0.0
    %521 = vmatprep.subr.mxu0 0.0
    %522 = vmatpush1.msra.mxu0 0.0
    %523 = vmatprep.subr.mxu0 0.0
    %524 = vmatpush1.msra.mxu0 0.0
    %525 = vmatprep.subr.mxu0 0.0
    %526 = vmatpush1.msra.mxu0 0.0
    %527 = vmatprep.subr.mxu0 0.0
    %528 = vmatpush1.msra.mxu0 0.0
    %529 = vmatprep.subr.mxu0 0.0
    %530 = vmatpush1.msra.mxu0 0.0
    %531 = vmatprep.subr.mxu0 0.0
    %532 = vmatpush1.msra.mxu0 0.0
    %533 = vmatprep.subr.mxu0 0.0
    %534 = vmatpush1.msra.mxu0 0.0
    %535 = vmatprep.subr.mxu0 0.0
    %536 = vmatpush1.msra.mxu0 0.0
    %537 = vmatprep.subr.mxu0 0.0
    %538 = vmatpush1.msra.mxu0 0.0
    %539 = vmatprep.subr.mxu0 0.0
    %540 = vmatpush1.msra.mxu0 0.0
    %541 = vmatprep.subr.mxu0 0.0
    %542 = vmatpush1.msra.mxu0 0.0
    %543 = vmatprep.subr.mxu0 0.0
    %544 = vmatpush1.msra.mxu0 0.0
    %545 = vmatprep.subr.mxu0 0.0
    %546 = vmatpush1.msra.mxu0 0.0
    %547 = vmatprep.subr.mxu0 0.0
    %548 = vmatpush1.msra.mxu0 0.0
    %549 = vmatprep.subr.mxu0 0.0
    %550 = vmatpush1.msra.mxu0 0.0
    %551 = vmatprep.subr.mxu0 0.0
    %552 = vmatpush1.msra.mxu0 0.0
    %553 = vmatprep.subr.mxu0 0.0
    %554 = vmatpush1.msra.mxu0 0.0
    %555 = vmatprep.subr.mxu0 0.0
    %556 = vmatpush1.msra.mxu0 0.0
    %557 = vmatprep.subr.mxu0 0.0
    %558 = vmatpush1.msra.mxu0 0.0
    %559 = vmatprep.subr.mxu0 0.0
    %560 = vmatpush1.msra.mxu0 0.0
    %561 = vmatprep.subr.mxu0 0.0
    %562 = vmatpush1.msra.mxu0 0.0
    %563 = vmatprep.mubr.f32.mxu0 0.0
    %564 = vmatmul.mubr.f32.gmra.mrb[0].mxu0 %v76
    %v565 = vpop.f32.mrb[0].mxu0
    %v566 = vadd.f32 0.0, %v565
    %v567 = vpop.f32.mrb[0].mxu0
    %568 = vmatprep.mubr.f32.mxu0 0.0
    %569 = vmatmul.mubr.f32.gmra.mrb[0].mxu0 %v79
    %v570 = vpop.f32.mrb[0].mxu0
    %v571 = vadd.f32 0.0, %v570
    %v572 = vpop.f32.mrb[0].mxu0
    %573 = vdwg.mxu0
    %v574 = vmul.f32 %v328, %v566
    %v575 = vmul.f32 %v329, %v571
    %v576 = vsub.f32 %v574, %v156
    %v577 = vsub.f32 %v575, %v157
    %v579 = vsel %vm158, %v576, 0
    %v582 = vsel %vm158, %v577, 0
    %v585 = vsel %vm165, %v38, 0
    %587 = vmatprep.subr.mxu0 0.0
    %588 = vmatpush1.msra.mxu0 %v585
    %589 = vmatprep.subr.mxu0 0.0
    %590 = vmatpush1.msra.mxu0 0.0
    %591 = vmatprep.subr.mxu0 0.0
    %592 = vmatpush1.msra.mxu0 0.0
    %593 = vmatprep.subr.mxu0 0.0
    %594 = vmatpush1.msra.mxu0 0.0
    %595 = vmatprep.subr.mxu0 0.0
    %596 = vmatpush1.msra.mxu0 0.0
    %597 = vmatprep.subr.mxu0 0.0
    %598 = vmatpush1.msra.mxu0 0.0
    %599 = vmatprep.subr.mxu0 0.0
    %600 = vmatpush1.msra.mxu0 0.0
    %601 = vmatprep.subr.mxu0 0.0
    %602 = vmatpush1.msra.mxu0 0.0
    %603 = vmatprep.subr.mxu0 0.0
    %604 = vmatpush1.msra.mxu0 0.0
    %605 = vmatprep.subr.mxu0 0.0
    %606 = vmatpush1.msra.mxu0 0.0
    %607 = vmatprep.subr.mxu0 0.0
    %608 = vmatpush1.msra.mxu0 0.0
    %609 = vmatprep.subr.mxu0 0.0
    %610 = vmatpush1.msra.mxu0 0.0
    %611 = vmatprep.subr.mxu0 0.0
    %612 = vmatpush1.msra.mxu0 0.0
    %613 = vmatprep.subr.mxu0 0.0
    %614 = vmatpush1.msra.mxu0 0.0
    %615 = vmatprep.subr.mxu0 0.0
    %616 = vmatpush1.msra.mxu0 0.0
    %617 = vmatprep.subr.mxu0 0.0
    %618 = vmatpush1.msra.mxu0 0.0
    %619 = vmatprep.subr.mxu0 0.0
    %620 = vmatpush1.msra.mxu0 0.0
    %621 = vmatprep.subr.mxu0 0.0
    %622 = vmatpush1.msra.mxu0 0.0
    %623 = vmatprep.subr.mxu0 0.0
    %624 = vmatpush1.msra.mxu0 0.0
    %625 = vmatprep.subr.mxu0 0.0
    %626 = vmatpush1.msra.mxu0 0.0
    %627 = vmatprep.subr.mxu0 0.0
    %628 = vmatpush1.msra.mxu0 0.0
    %629 = vmatprep.subr.mxu0 0.0
    %630 = vmatpush1.msra.mxu0 0.0
    %631 = vmatprep.subr.mxu0 0.0
    %632 = vmatpush1.msra.mxu0 0.0
    %633 = vmatprep.subr.mxu0 0.0
    %634 = vmatpush1.msra.mxu0 0.0
    %635 = vmatprep.subr.mxu0 0.0
    %636 = vmatpush1.msra.mxu0 0.0
    %637 = vmatprep.subr.mxu0 0.0
    %638 = vmatpush1.msra.mxu0 0.0
    %639 = vmatprep.subr.mxu0 0.0
    %640 = vmatpush1.msra.mxu0 0.0
    %641 = vmatprep.subr.mxu0 0.0
    %642 = vmatpush1.msra.mxu0 0.0
    %643 = vmatprep.subr.mxu0 0.0
    %644 = vmatpush1.msra.mxu0 0.0
    %645 = vmatprep.subr.mxu0 0.0
    %646 = vmatpush1.msra.mxu0 0.0
    %647 = vmatprep.subr.mxu0 0.0
    %648 = vmatpush1.msra.mxu0 0.0
    %649 = vmatprep.subr.mxu0 0.0
    %650 = vmatpush1.msra.mxu0 0.0
    %651 = vmatprep.mubr.f32.mxu0 0.0
    %652 = vmatmul.mubr.f32.gmra.mrb[0].mxu0 %v579
    %v653 = vpop.f32.mrb[0].mxu0
    %v654 = vadd.f32 0.0, %v653
    %v655 = vpop.f32.mrb[0].mxu0
    %656 = vmatprep.mubr.f32.mxu0 0.0
    %657 = vmatmul.mubr.f32.gmra.mrb[0].mxu0 %v582
    %v658 = vpop.f32.mrb[0].mxu0
    %v659 = vadd.f32 0.0, %v658
    %v660 = vpop.f32.mrb[0].mxu0
    %661 = vdwg.mxu0
    %v662 = vadd.f32 %v495, %v654
    %v663 = vadd.f32 %v496, %v659
    %v665 = vlaneseq
    %v666 = vshrl.u32 %v665, 7
    %v667 = vsub.s32 0, %v666
    %v668 = vrot.slane %v39, %v667
    %v670 = vadd.f32 %v662, %v668
    %v671 = vadd.f32 %v663, %v668
    %v672 = vmax.f32 %v670, 0.0
    %v673 = vmax.f32 %v671, 0.0
    %674 = vst [vmem:[#allocation5] sm:$0xff] %v672
    %675 = vst [vmem:[#allocation5 + $0x8] sm:$0xff] %v673
    %s676 = scalar_lea.vmem %s0, 16
    %v677 = vld [vmem:[%s676] sm:$0xff]
    %v678 = vld [vmem:[%s676 + $0x8] sm:$0xff]
    %s679 = scalar_lea.vmem %s1, 16
    %v680 = vld [vmem:[%s679] sm:$0xff]
    %v681 = vld [vmem:[%s679 + $0x8] sm:$0xff]
    %v682 = vsel %vm44, %v680, 0.0
    %683 = vadd.xlane.f32.xlu0 %v682
    %v684 = vpop.xlane.xlu0 %683
    %v685 = vsel %vm44, %v681, 0.0
    %686 = vadd.xlane.f32.xlu0 %v685
    %v687 = vpop.xlane.xlu0 %686
    %v688 = vadd.f32 %v684, 1e-06
    %v689 = vadd.f32 %v687, 1e-06
    %v690 = vrsqrt.pop %v688
    %v691 = vmul.f32 %v688, %v690
    %vm692 = vcmp.eq.f32.partialorder %v688, inf
    %v693 = vsel %vm692, %v688, %v691
    %vm694 = vcmp.eq.f32.partialorder %v688, 0.0
    %v695 = vand.u32 %v688, 2147483648
    %v696 = vsel %vm694, %v695, %v693
    %v697 = vrsqrt.pop %v689
    %v698 = vmul.f32 %v689, %v697
    %vm699 = vcmp.eq.f32.partialorder %v689, inf
    %v700 = vsel %vm699, %v689, %v698
    %vm701 = vcmp.eq.f32.partialorder %v689, 0.0
    %v702 = vand.u32 %v689, 2147483648
    %v703 = vsel %vm701, %v702, %v700
    %v704 = vrcp.pop %v696
    %v705 = vmul.f32 1.0, %v704
    %v706 = vrcp.pop %v703
    %v707 = vmul.f32 1.0, %v706
    %v708 = vsub.f32 0.0, %v705
    %v709 = vsub.f32 0.0, %v707
    %v710 = vmul.f32 %v705, %v677
    %v711 = vmul.f32 %v707, %v678
    %v713 = vsel %vm44, %v680, 0
    %v716 = vsel %vm44, %v681, 0
    %718 = vmatprep.subr.mxu0 0.0
    %719 = vmatpush1.msra.mxu0 %v710
    %720 = vmatprep.subr.mxu0 0.0
    %721 = vmatpush1.msra.mxu0 %v711
    %722 = vmatprep.subr.mxu0 0.0
    %723 = vmatpush1.msra.mxu0 0.0
    %724 = vmatprep.subr.mxu0 0.0
    %725 = vmatpush1.msra.mxu0 0.0
    %726 = vmatprep.subr.mxu0 0.0
    %727 = vmatpush1.msra.mxu0 0.0
    %728 = vmatprep.subr.mxu0 0.0
    %729 = vmatpush1.msra.mxu0 0.0
    %730 = vmatprep.subr.mxu0 0.0
    %731 = vmatpush1.msra.mxu0 0.0
    %732 = vmatprep.subr.mxu0 0.0
    %733 = vmatpush1.msra.mxu0 0.0
    %734 = vmatprep.subr.mxu0 0.0
    %735 = vmatpush1.msra.mxu0 0.0
    %736 = vmatprep.subr.mxu0 0.0
    %737 = vmatpush1.msra.mxu0 0.0
    %738 = vmatprep.subr.mxu0 0.0
    %739 = vmatpush1.msra.mxu0 0.0
    %740 = vmatprep.subr.mxu0 0.0
    %741 = vmatpush1.msra.mxu0 0.0
    %742 = vmatprep.subr.mxu0 0.0
    %743 = vmatpush1.msra.mxu0 0.0
    %744 = vmatprep.subr.mxu0 0.0
    %745 = vmatpush1.msra.mxu0 0.0
    %746 = vmatprep.subr.mxu0 0.0
    %747 = vmatpush1.msra.mxu0 0.0
    %748 = vmatprep.subr.mxu0 0.0
    %749 = vmatpush1.msra.mxu0 0.0
    %750 = vmatprep.subr.mxu0 0.0
    %751 = vmatpush1.msra.mxu0 0.0
    %752 = vmatprep.subr.mxu0 0.0
    %753 = vmatpush1.msra.mxu0 0.0
    %754 = vmatprep.subr.mxu0 0.0
    %755 = vmatpush1.msra.mxu0 0.0
    %756 = vmatprep.subr.mxu0 0.0
    %757 = vmatpush1.msra.mxu0 0.0
    %758 = vmatprep.subr.mxu0 0.0
    %759 = vmatpush1.msra.mxu0 0.0
    %760 = vmatprep.subr.mxu0 0.0
    %761 = vmatpush1.msra.mxu0 0.0
    %762 = vmatprep.subr.mxu0 0.0
    %763 = vmatpush1.msra.mxu0 0.0
    %764 = vmatprep.subr.mxu0 0.0
    %765 = vmatpush1.msra.mxu0 0.0
    %766 = vmatprep.subr.mxu0 0.0
    %767 = vmatpush1.msra.mxu0 0.0
    %768 = vmatprep.subr.mxu0 0.0
    %769 = vmatpush1.msra.mxu0 0.0
    %770 = vmatprep.subr.mxu0 0.0
    %771 = vmatpush1.msra.mxu0 0.0
    %772 = vmatprep.subr.mxu0 0.0
    %773 = vmatpush1.msra.mxu0 0.0
    %774 = vmatprep.subr.mxu0 0.0
    %775 = vmatpush1.msra.mxu0 0.0
    %776 = vmatprep.subr.mxu0 0.0
    %777 = vmatpush1.msra.mxu0 0.0
    %778 = vmatprep.subr.mxu0 0.0
    %779 = vmatpush1.msra.mxu0 0.0
    %780 = vmatprep.subr.mxu0 0.0
    %781 = vmatpush1.msra.mxu0 0.0
    %782 = vmatprep.mubr.f32.mxu0 0.0
    %783 = vmatmul.mubr.f32.gmra.mrb[0].mxu0 %v713
    %v784 = vpop.f32.mrb[0].mxu0
    %v785 = vadd.f32 0.0, %v784
    %v786 = vpop.f32.mrb[0].mxu0
    %787 = vmatprep.mubr.f32.mxu0 0.0
    %788 = vmatmul.mubr.f32.gmra.mrb[0].mxu0 %v716
    %v789 = vpop.f32.mrb[0].mxu0
    %v790 = vadd.f32 0.0, %v789
    %v791 = vpop.f32.mrb[0].mxu0
    %792 = vdwg.mxu0
    %v793 = vmul.f32 %v708, %v785
    %v794 = vmul.f32 %v709, %v790
    %v796 = vsel %vm158, %v793, 0
    %v799 = vsel %vm158, %v794, 0
    %801 = vmatprep.subr.mxu0 0.0
    %802 = vmatpush1.msra.mxu0 %v167
    %803 = vmatprep.subr.mxu0 0.0
    %804 = vmatpush1.msra.mxu0 0.0
    %805 = vmatprep.subr.mxu0 0.0
    %806 = vmatpush1.msra.mxu0 0.0
    %807 = vmatprep.subr.mxu0 0.0
    %808 = vmatpush1.msra.mxu0 0.0
    %809 = vmatprep.subr.mxu0 0.0
    %810 = vmatpush1.msra.mxu0 0.0
    %811 = vmatprep.subr.mxu0 0.0
    %812 = vmatpush1.msra.mxu0 0.0
    %813 = vmatprep.subr.mxu0 0.0
    %814 = vmatpush1.msra.mxu0 0.0
    %815 = vmatprep.subr.mxu0 0.0
    %816 = vmatpush1.msra.mxu0 0.0
    %817 = vmatprep.subr.mxu0 0.0
    %818 = vmatpush1.msra.mxu0 0.0
    %819 = vmatprep.subr.mxu0 0.0
    %820 = vmatpush1.msra.mxu0 0.0
    %821 = vmatprep.subr.mxu0 0.0
    %822 = vmatpush1.msra.mxu0 0.0
    %823 = vmatprep.subr.mxu0 0.0
    %824 = vmatpush1.msra.mxu0 0.0
    %825 = vmatprep.subr.mxu0 0.0
    %826 = vmatpush1.msra.mxu0 0.0
    %827 = vmatprep.subr.mxu0 0.0
    %828 = vmatpush1.msra.mxu0 0.0
    %829 = vmatprep.subr.mxu0 0.0
    %830 = vmatpush1.msra.mxu0 0.0
    %831 = vmatprep.subr.mxu0 0.0
    %832 = vmatpush1.msra.mxu0 0.0
    %833 = vmatprep.subr.mxu0 0.0
    %834 = vmatpush1.msra.mxu0 0.0
    %835 = vmatprep.subr.mxu0 0.0
    %836 = vmatpush1.msra.mxu0 0.0
    %837 = vmatprep.subr.mxu0 0.0
    %838 = vmatpush1.msra.mxu0 0.0
    %839 = vmatprep.subr.mxu0 0.0
    %840 = vmatpush1.msra.mxu0 0.0
    %841 = vmatprep.subr.mxu0 0.0
    %842 = vmatpush1.msra.mxu0 0.0
    %843 = vmatprep.subr.mxu0 0.0
    %844 = vmatpush1.msra.mxu0 0.0
    %845 = vmatprep.subr.mxu0 0.0
    %846 = vmatpush1.msra.mxu0 0.0
    %847 = vmatprep.subr.mxu0 0.0
    %848 = vmatpush1.msra.mxu0 0.0
    %849 = vmatprep.subr.mxu0 0.0
    %850 = vmatpush1.msra.mxu0 0.0
    %851 = vmatprep.subr.mxu0 0.0
    %852 = vmatpush1.msra.mxu0 0.0
    %853 = vmatprep.subr.mxu0 0.0
    %854 = vmatpush1.msra.mxu0 0.0
    %855 = vmatprep.subr.mxu0 0.0
    %856 = vmatpush1.msra.mxu0 0.0
    %857 = vmatprep.subr.mxu0 0.0
    %858 = vmatpush1.msra.mxu0 0.0
    %859 = vmatprep.subr.mxu0 0.0
    %860 = vmatpush1.msra.mxu0 0.0
    %861 = vmatprep.subr.mxu0 0.0
    %862 = vmatpush1.msra.mxu0 0.0
    %863 = vmatprep.subr.mxu0 0.0
    %864 = vmatpush1.msra.mxu0 0.0
    %865 = vmatprep.mubr.f32.mxu0 0.0
    %866 = vmatmul.mubr.f32.gmra.mrb[0].mxu0 %v796
    %v867 = vpop.f32.mrb[0].mxu0
    %v868 = vadd.f32 0.0, %v867
    %v869 = vpop.f32.mrb[0].mxu0
    %870 = vmatprep.mubr.f32.mxu0 0.0
    %871 = vmatmul.mubr.f32.gmra.mrb[0].mxu0 %v799
    %v872 = vpop.f32.mrb[0].mxu0
    %v873 = vadd.f32 0.0, %v872
    %v874 = vpop.f32.mrb[0].mxu0
    %875 = vdwg.mxu0
    %v877 = vsel %vm158, %v677, 0
    %v880 = vsel %vm158, %v678, 0
    %882 = vmatprep.subr.mxu0 0.0
    %883 = vmatpush1.msra.mxu0 %v251
    %884 = vmatprep.subr.mxu0 0.0
    %885 = vmatpush1.msra.mxu0 0.0
    %886 = vmatprep.subr.mxu0 0.0
    %887 = vmatpush1.msra.mxu0 0.0
    %888 = vmatprep.subr.mxu0 0.0
    %889 = vmatpush1.msra.mxu0 0.0
    %890 = vmatprep.subr.mxu0 0.0
    %891 = vmatpush1.msra.mxu0 0.0
    %892 = vmatprep.subr.mxu0 0.0
    %893 = vmatpush1.msra.mxu0 0.0
    %894 = vmatprep.subr.mxu0 0.0
    %895 = vmatpush1.msra.mxu0 0.0
    %896 = vmatprep.subr.mxu0 0.0
    %897 = vmatpush1.msra.mxu0 0.0
    %898 = vmatprep.subr.mxu0 0.0
    %899 = vmatpush1.msra.mxu0 0.0
    %900 = vmatprep.subr.mxu0 0.0
    %901 = vmatpush1.msra.mxu0 0.0
    %902 = vmatprep.subr.mxu0 0.0
    %903 = vmatpush1.msra.mxu0 0.0
    %904 = vmatprep.subr.mxu0 0.0
    %905 = vmatpush1.msra.mxu0 0.0
    %906 = vmatprep.subr.mxu0 0.0
    %907 = vmatpush1.msra.mxu0 0.0
    %908 = vmatprep.subr.mxu0 0.0
    %909 = vmatpush1.msra.mxu0 0.0
    %910 = vmatprep.subr.mxu0 0.0
    %911 = vmatpush1.msra.mxu0 0.0
    %912 = vmatprep.subr.mxu0 0.0
    %913 = vmatpush1.msra.mxu0 0.0
    %914 = vmatprep.subr.mxu0 0.0
    %915 = vmatpush1.msra.mxu0 0.0
    %916 = vmatprep.subr.mxu0 0.0
    %917 = vmatpush1.msra.mxu0 0.0
    %918 = vmatprep.subr.mxu0 0.0
    %919 = vmatpush1.msra.mxu0 0.0
    %920 = vmatprep.subr.mxu0 0.0
    %921 = vmatpush1.msra.mxu0 0.0
    %922 = vmatprep.subr.mxu0 0.0
    %923 = vmatpush1.msra.mxu0 0.0
    %924 = vmatprep.subr.mxu0 0.0
    %925 = vmatpush1.msra.mxu0 0.0
    %926 = vmatprep.subr.mxu0 0.0
    %927 = vmatpush1.msra.mxu0 0.0
    %928 = vmatprep.subr.mxu0 0.0
    %929 = vmatpush1.msra.mxu0 0.0
    %930 = vmatprep.subr.mxu0 0.0
    %931 = vmatpush1.msra.mxu0 0.0
    %932 = vmatprep.subr.mxu0 0.0
    %933 = vmatpush1.msra.mxu0 0.0
    %934 = vmatprep.subr.mxu0 0.0
    %935 = vmatpush1.msra.mxu0 0.0
    %936 = vmatprep.subr.mxu0 0.0
    %937 = vmatpush1.msra.mxu0 0.0
    %938 = vmatprep.subr.mxu0 0.0
    %939 = vmatpush1.msra.mxu0 0.0
    %940 = vmatprep.subr.mxu0 0.0
    %941 = vmatpush1.msra.mxu0 0.0
    %942 = vmatprep.subr.mxu0 0.0
    %943 = vmatpush1.msra.mxu0 0.0
    %944 = vmatprep.subr.mxu0 0.0
    %945 = vmatpush1.msra.mxu0 0.0
    %946 = vmatprep.mubr.f32.mxu0 0.0
    %947 = vmatmul.mubr.f32.gmra.mrb[0].mxu0 %v877
    %v948 = vpop.f32.mrb[0].mxu0
    %v949 = vadd.f32 %v868, %v948
    %v950 = vpop.f32.mrb[0].mxu0
    %951 = vmatprep.mubr.f32.mxu0 0.0
    %952 = vmatmul.mubr.f32.gmra.mrb[0].mxu0 %v880
    %v953 = vpop.f32.mrb[0].mxu0
    %v954 = vadd.f32 %v873, %v953
    %v955 = vpop.f32.mrb[0].mxu0
    %956 = vdwg.mxu0
    %v957 = vmul.f32 %v705, -2.0
    %v958 = vmul.f32 %v707, -2.0
    %v959 = vmul.f32 %v705, %v793
    %v960 = vmul.f32 %v707, %v794
    %961 = vmatprep.subr.mxu0 0.0
    %962 = vmatpush1.msra.mxu0 %v959
    %963 = vmatprep.subr.mxu0 0.0
    %964 = vmatpush1.msra.mxu0 %v960
    %965 = vmatprep.subr.mxu0 0.0
    %966 = vmatpush1.msra.mxu0 0.0
    %967 = vmatprep.subr.mxu0 0.0
    %968 = vmatpush1.msra.mxu0 0.0
    %969 = vmatprep.subr.mxu0 0.0
    %970 = vmatpush1.msra.mxu0 0.0
    %971 = vmatprep.subr.mxu0 0.0
    %972 = vmatpush1.msra.mxu0 0.0
    %973 = vmatprep.subr.mxu0 0.0
    %974 = vmatpush1.msra.mxu0 0.0
    %975 = vmatprep.subr.mxu0 0.0
    %976 = vmatpush1.msra.mxu0 0.0
    %977 = vmatprep.subr.mxu0 0.0
    %978 = vmatpush1.msra.mxu0 0.0
    %979 = vmatprep.subr.mxu0 0.0
    %980 = vmatpush1.msra.mxu0 0.0
    %981 = vmatprep.subr.mxu0 0.0
    %982 = vmatpush1.msra.mxu0 0.0
    %983 = vmatprep.subr.mxu0 0.0
    %984 = vmatpush1.msra.mxu0 0.0
    %985 = vmatprep.subr.mxu0 0.0
    %986 = vmatpush1.msra.mxu0 0.0
    %987 = vmatprep.subr.mxu0 0.0
    %988 = vmatpush1.msra.mxu0 0.0
    %989 = vmatprep.subr.mxu0 0.0
    %990 = vmatpush1.msra.mxu0 0.0
    %991 = vmatprep.subr.mxu0 0.0
    %992 = vmatpush1.msra.mxu0 0.0
    %993 = vmatprep.subr.mxu0 0.0
    %994 = vmatpush1.msra.mxu0 0.0
    %995 = vmatprep.subr.mxu0 0.0
    %996 = vmatpush1.msra.mxu0 0.0
    %997 = vmatprep.subr.mxu0 0.0
    %998 = vmatpush1.msra.mxu0 0.0
    %999 = vmatprep.subr.mxu0 0.0
    %1000 = vmatpush1.msra.mxu0 0.0
    %1001 = vmatprep.subr.mxu0 0.0
    %1002 = vmatpush1.msra.mxu0 0.0
    %1003 = vmatprep.subr.mxu0 0.0
    %1004 = vmatpush1.msra.mxu0 0.0
    %1005 = vmatprep.subr.mxu0 0.0
    %1006 = vmatpush1.msra.mxu0 0.0
    %1007 = vmatprep.subr.mxu0 0.0
    %1008 = vmatpush1.msra.mxu0 0.0
    %1009 = vmatprep.subr.mxu0 0.0
    %1010 = vmatpush1.msra.mxu0 0.0
    %1011 = vmatprep.subr.mxu0 0.0
    %1012 = vmatpush1.msra.mxu0 0.0
    %1013 = vmatprep.subr.mxu0 0.0
    %1014 = vmatpush1.msra.mxu0 0.0
    %1015 = vmatprep.subr.mxu0 0.0
    %1016 = vmatpush1.msra.mxu0 0.0
    %1017 = vmatprep.subr.mxu0 0.0
    %1018 = vmatpush1.msra.mxu0 0.0
    %1019 = vmatprep.subr.mxu0 0.0
    %1020 = vmatpush1.msra.mxu0 0.0
    %1021 = vmatprep.subr.mxu0 0.0
    %1022 = vmatpush1.msra.mxu0 0.0
    %1023 = vmatprep.subr.mxu0 0.0
    %1024 = vmatpush1.msra.mxu0 0.0
    %1025 = vmatprep.mubr.f32.mxu0 0.0
    %1026 = vmatmul.mubr.f32.gmra.mrb[0].mxu0 %v713
    %v1027 = vpop.f32.mrb[0].mxu0
    %v1028 = vadd.f32 0.0, %v1027
    %v1029 = vpop.f32.mrb[0].mxu0
    %1030 = vmatprep.mubr.f32.mxu0 0.0
    %1031 = vmatmul.mubr.f32.gmra.mrb[0].mxu0 %v716
    %v1032 = vpop.f32.mrb[0].mxu0
    %v1033 = vadd.f32 0.0, %v1032
    %v1034 = vpop.f32.mrb[0].mxu0
    %1035 = vdwg.mxu0
    %v1036 = vmul.f32 %v957, %v1028
    %v1037 = vmul.f32 %v958, %v1033
    %v1038 = vsub.f32 %v1036, %v677
    %v1039 = vsub.f32 %v1037, %v678
    %v1041 = vsel %vm158, %v1038, 0
    %v1044 = vsel %vm158, %v1039, 0
    %1046 = vmatprep.subr.mxu0 0.0
    %1047 = vmatpush1.msra.mxu0 %v418
    %1048 = vmatprep.subr.mxu0 0.0
    %1049 = vmatpush1.msra.mxu0 0.0
    %1050 = vmatprep.subr.mxu0 0.0
    %1051 = vmatpush1.msra.mxu0 0.0
    %1052 = vmatprep.subr.mxu0 0.0
    %1053 = vmatpush1.msra.mxu0 0.0
    %1054 = vmatprep.subr.mxu0 0.0
    %1055 = vmatpush1.msra.mxu0 0.0
    %1056 = vmatprep.subr.mxu0 0.0
    %1057 = vmatpush1.msra.mxu0 0.0
    %1058 = vmatprep.subr.mxu0 0.0
    %1059 = vmatpush1.msra.mxu0 0.0
    %1060 = vmatprep.subr.mxu0 0.0
    %1061 = vmatpush1.msra.mxu0 0.0
    %1062 = vmatprep.subr.mxu0 0.0
    %1063 = vmatpush1.msra.mxu0 0.0
    %1064 = vmatprep.subr.mxu0 0.0
    %1065 = vmatpush1.msra.mxu0 0.0
    %1066 = vmatprep.subr.mxu0 0.0
    %1067 = vmatpush1.msra.mxu0 0.0
    %1068 = vmatprep.subr.mxu0 0.0
    %1069 = vmatpush1.msra.mxu0 0.0
    %1070 = vmatprep.subr.mxu0 0.0
    %1071 = vmatpush1.msra.mxu0 0.0
    %1072 = vmatprep.subr.mxu0 0.0
    %1073 = vmatpush1.msra.mxu0 0.0
    %1074 = vmatprep.subr.mxu0 0.0
    %1075 = vmatpush1.msra.mxu0 0.0
    %1076 = vmatprep.subr.mxu0 0.0
    %1077 = vmatpush1.msra.mxu0 0.0
    %1078 = vmatprep.subr.mxu0 0.0
    %1079 = vmatpush1.msra.mxu0 0.0
    %1080 = vmatprep.subr.mxu0 0.0
    %1081 = vmatpush1.msra.mxu0 0.0
    %1082 = vmatprep.subr.mxu0 0.0
    %1083 = vmatpush1.msra.mxu0 0.0
    %1084 = vmatprep.subr.mxu0 0.0
    %1085 = vmatpush1.msra.mxu0 0.0
    %1086 = vmatprep.subr.mxu0 0.0
    %1087 = vmatpush1.msra.mxu0 0.0
    %1088 = vmatprep.subr.mxu0 0.0
    %1089 = vmatpush1.msra.mxu0 0.0
    %1090 = vmatprep.subr.mxu0 0.0
    %1091 = vmatpush1.msra.mxu0 0.0
    %1092 = vmatprep.subr.mxu0 0.0
    %1093 = vmatpush1.msra.mxu0 0.0
    %1094 = vmatprep.subr.mxu0 0.0
    %1095 = vmatpush1.msra.mxu0 0.0
    %1096 = vmatprep.subr.mxu0 0.0
    %1097 = vmatpush1.msra.mxu0 0.0
    %1098 = vmatprep.subr.mxu0 0.0
    %1099 = vmatpush1.msra.mxu0 0.0
    %1100 = vmatprep.subr.mxu0 0.0
    %1101 = vmatpush1.msra.mxu0 0.0
    %1102 = vmatprep.subr.mxu0 0.0
    %1103 = vmatpush1.msra.mxu0 0.0
    %1104 = vmatprep.subr.mxu0 0.0
    %1105 = vmatpush1.msra.mxu0 0.0
    %1106 = vmatprep.subr.mxu0 0.0
    %1107 = vmatpush1.msra.mxu0 0.0
    %1108 = vmatprep.subr.mxu0 0.0
    %1109 = vmatpush1.msra.mxu0 0.0
    %1110 = vmatprep.mubr.f32.mxu0 0.0
    %1111 = vmatmul.mubr.f32.gmra.mrb[0].mxu0 %v1041
    %v1112 = vpop.f32.mrb[0].mxu0
    %v1113 = vadd.f32 0.0, %v1112
    %v1114 = vpop.f32.mrb[0].mxu0
    %1115 = vmatprep.mubr.f32.mxu0 0.0
    %1116 = vmatmul.mubr.f32.gmra.mrb[0].mxu0 %v1044
    %v1117 = vpop.f32.mrb[0].mxu0
    %v1118 = vadd.f32 0.0, %v1117
    %v1119 = vpop.f32.mrb[0].mxu0
    %1120 = vdwg.mxu0
    %v1121 = vadd.f32 %v949, %v1113
    %v1122 = vadd.f32 %v954, %v1118
    %v1123 = vmul.f32 %v705, %v1038
    %v1124 = vmul.f32 %v707, %v1039
    %1125 = vmatprep.subr.mxu0 0.0
    %1126 = vmatpush1.msra.mxu0 %v1123
    %1127 = vmatprep.subr.mxu0 0.0
    %1128 = vmatpush1.msra.mxu0 %v1124
    %1129 = vmatprep.subr.mxu0 0.0
    %1130 = vmatpush1.msra.mxu0 0.0
    %1131 = vmatprep.subr.mxu0 0.0
    %1132 = vmatpush1.msra.mxu0 0.0
    %1133 = vmatprep.subr.mxu0 0.0
    %1134 = vmatpush1.msra.mxu0 0.0
    %1135 = vmatprep.subr.mxu0 0.0
    %1136 = vmatpush1.msra.mxu0 0.0
    %1137 = vmatprep.subr.mxu0 0.0
    %1138 = vmatpush1.msra.mxu0 0.0
    %1139 = vmatprep.subr.mxu0 0.0
    %1140 = vmatpush1.msra.mxu0 0.0
    %1141 = vmatprep.subr.mxu0 0.0
    %1142 = vmatpush1.msra.mxu0 0.0
    %1143 = vmatprep.subr.mxu0 0.0
    %1144 = vmatpush1.msra.mxu0 0.0
    %1145 = vmatprep.subr.mxu0 0.0
    %1146 = vmatpush1.msra.mxu0 0.0
    %1147 = vmatprep.subr.mxu0 0.0
    %1148 = vmatpush1.msra.mxu0 0.0
    %1149 = vmatprep.subr.mxu0 0.0
    %1150 = vmatpush1.msra.mxu0 0.0
    %1151 = vmatprep.subr.mxu0 0.0
    %1152 = vmatpush1.msra.mxu0 0.0
    %1153 = vmatprep.subr.mxu0 0.0
    %1154 = vmatpush1.msra.mxu0 0.0
    %1155 = vmatprep.subr.mxu0 0.0
    %1156 = vmatpush1.msra.mxu0 0.0
    %1157 = vmatprep.subr.mxu0 0.0
    %1158 = vmatpush1.msra.mxu0 0.0
    %1159 = vmatprep.subr.mxu0 0.0
    %1160 = vmatpush1.msra.mxu0 0.0
    %1161 = vmatprep.subr.mxu0 0.0
    %1162 = vmatpush1.msra.mxu0 0.0
    %1163 = vmatprep.subr.mxu0 0.0
    %1164 = vmatpush1.msra.mxu0 0.0
    %1165 = vmatprep.subr.mxu0 0.0
    %1166 = vmatpush1.msra.mxu0 0.0
    %1167 = vmatprep.subr.mxu0 0.0
    %1168 = vmatpush1.msra.mxu0 0.0
    %1169 = vmatprep.subr.mxu0 0.0
    %1170 = vmatpush1.msra.mxu0 0.0
    %1171 = vmatprep.subr.mxu0 0.0
    %1172 = vmatpush1.msra.mxu0 0.0
    %1173 = vmatprep.subr.mxu0 0.0
    %1174 = vmatpush1.msra.mxu0 0.0
    %1175 = vmatprep.subr.mxu0 0.0
    %1176 = vmatpush1.msra.mxu0 0.0
    %1177 = vmatprep.subr.mxu0 0.0
    %1178 = vmatpush1.msra.mxu0 0.0
    %1179 = vmatprep.subr.mxu0 0.0
    %1180 = vmatpush1.msra.mxu0 0.0
    %1181 = vmatprep.subr.mxu0 0.0
    %1182 = vmatpush1.msra.mxu0 0.0
    %1183 = vmatprep.subr.mxu0 0.0
    %1184 = vmatpush1.msra.mxu0 0.0
    %1185 = vmatprep.subr.mxu0 0.0
    %1186 = vmatpush1.msra.mxu0 0.0
    %1187 = vmatprep.subr.mxu0 0.0
    %1188 = vmatpush1.msra.mxu0 0.0
    %1189 = vmatprep.mubr.f32.mxu0 0.0
    %1190 = vmatmul.mubr.f32.gmra.mrb[0].mxu0 %v713
    %v1191 = vpop.f32.mrb[0].mxu0
    %v1192 = vadd.f32 0.0, %v1191
    %v1193 = vpop.f32.mrb[0].mxu0
    %1194 = vmatprep.mubr.f32.mxu0 0.0
    %1195 = vmatmul.mubr.f32.gmra.mrb[0].mxu0 %v716
    %v1196 = vpop.f32.mrb[0].mxu0
    %v1197 = vadd.f32 0.0, %v1196
    %v1198 = vpop.f32.mrb[0].mxu0
    %1199 = vdwg.mxu0
    %v1200 = vmul.f32 %v957, %v1192
    %v1201 = vmul.f32 %v958, %v1197
    %v1202 = vsub.f32 %v1200, %v793
    %v1203 = vsub.f32 %v1201, %v794
    %v1205 = vsel %vm158, %v1202, 0
    %v1208 = vsel %vm158, %v1203, 0
    %1210 = vmatprep.subr.mxu0 0.0
    %1211 = vmatpush1.msra.mxu0 %v585
    %1212 = vmatprep.subr.mxu0 0.0
    %1213 = vmatpush1.msra.mxu0 0.0
    %1214 = vmatprep.subr.mxu0 0.0
    %1215 = vmatpush1.msra.mxu0 0.0
    %1216 = vmatprep.subr.mxu0 0.0
    %1217 = vmatpush1.msra.mxu0 0.0
    %1218 = vmatprep.subr.mxu0 0.0
    %1219 = vmatpush1.msra.mxu0 0.0
    %1220 = vmatprep.subr.mxu0 0.0
    %1221 = vmatpush1.msra.mxu0 0.0
    %1222 = vmatprep.subr.mxu0 0.0
    %1223 = vmatpush1.msra.mxu0 0.0
    %1224 = vmatprep.subr.mxu0 0.0
    %1225 = vmatpush1.msra.mxu0 0.0
    %1226 = vmatprep.subr.mxu0 0.0
    %1227 = vmatpush1.msra.mxu0 0.0
    %1228 = vmatprep.subr.mxu0 0.0
    %1229 = vmatpush1.msra.mxu0 0.0
    %1230 = vmatprep.subr.mxu0 0.0
    %1231 = vmatpush1.msra.mxu0 0.0
    %1232 = vmatprep.subr.mxu0 0.0
    %1233 = vmatpush1.msra.mxu0 0.0
    %1234 = vmatprep.subr.mxu0 0.0
    %1235 = vmatpush1.msra.mxu0 0.0
    %1236 = vmatprep.subr.mxu0 0.0
    %1237 = vmatpush1.msra.mxu0 0.0
    %1238 = vmatprep.subr.mxu0 0.0
    %1239 = vmatpush1.msra.mxu0 0.0
    %1240 = vmatprep.subr.mxu0 0.0
    %1241 = vmatpush1.msra.mxu0 0.0
    %1242 = vmatprep.subr.mxu0 0.0
    %1243 = vmatpush1.msra.mxu0 0.0
    %1244 = vmatprep.subr.mxu0 0.0
    %1245 = vmatpush1.msra.mxu0 0.0
    %1246 = vmatprep.subr.mxu0 0.0
    %1247 = vmatpush1.msra.mxu0 0.0
    %1248 = vmatprep.subr.mxu0 0.0
    %1249 = vmatpush1.msra.mxu0 0.0
    %1250 = vmatprep.subr.mxu0 0.0
    %1251 = vmatpush1.msra.mxu0 0.0
    %1252 = vmatprep.subr.mxu0 0.0
    %1253 = vmatpush1.msra.mxu0 0.0
    %1254 = vmatprep.subr.mxu0 0.0
    %1255 = vmatpush1.msra.mxu0 0.0
    %1256 = vmatprep.subr.mxu0 0.0
    %1257 = vmatpush1.msra.mxu0 0.0
    %1258 = vmatprep.subr.mxu0 0.0
    %1259 = vmatpush1.msra.mxu0 0.0
    %1260 = vmatprep.subr.mxu0 0.0
    %1261 = vmatpush1.msra.mxu0 0.0
    %1262 = vmatprep.subr.mxu0 0.0
    %1263 = vmatpush1.msra.mxu0 0.0
    %1264 = vmatprep.subr.mxu0 0.0
    %1265 = vmatpush1.msra.mxu0 0.0
    %1266 = vmatprep.subr.mxu0 0.0
    %1267 = vmatpush1.msra.mxu0 0.0
    %1268 = vmatprep.subr.mxu0 0.0
    %1269 = vmatpush1.msra.mxu0 0.0
    %1270 = vmatprep.subr.mxu0 0.0
    %1271 = vmatpush1.msra.mxu0 0.0
    %1272 = vmatprep.subr.mxu0 0.0
    %1273 = vmatpush1.msra.mxu0 0.0
    %1274 = vmatprep.mubr.f32.mxu0 0.0
    %1275 = vmatmul.mubr.f32.gmra.mrb[0].mxu0 %v1205
    %v1276 = vpop.f32.mrb[0].mxu0
    %v1277 = vadd.f32 0.0, %v1276
    %v1278 = vpop.f32.mrb[0].mxu0
    %1279 = vmatprep.mubr.f32.mxu0 0.0
    %1280 = vmatmul.mubr.f32.gmra.mrb[0].mxu0 %v1208
    %v1281 = vpop.f32.mrb[0].mxu0
    %v1282 = vadd.f32 0.0, %v1281
    %v1283 = vpop.f32.mrb[0].mxu0
    %1284 = vdwg.mxu0
    %v1285 = vadd.f32 %v1121, %v1277
    %v1286 = vadd.f32 %v1122, %v1282
    %v1287 = vadd.f32 %v1285, %v668
    %v1288 = vadd.f32 %v1286, %v668
    %v1289 = vmax.f32 %v1287, 0.0
    %v1290 = vmax.f32 %v1288, 0.0
    %s1291 = scalar_lea.vmem [#allocation5], 16
    %1292 = vst [vmem:[%s1291] sm:$0xff] %v1289
    %1293 = vst [vmem:[%s1291 + $0x8] sm:$0xff] %v1290
    // Predicated region
    $region22: #{tpu_custom_call.1} parent=1 // pred_check
      _
    $region23: #{tpu_custom_call.1} parent=1 // pred_check_branch
      %1295 = sbr.rel (0) target = $region25
    $region24: #{tpu_custom_call.1} parent=1 // pred_region
      %s1297 = ssub.s32 512, 512
      %1298 = vsyncadd [#allocation4], %s1297
      %s1299 = sshll.u32 [#allocation5], 4
      %s1300 = int_to_ptr.vmem [resolvable:$true] %s1299
      %1305 = dma.vmem_to_hbm [thread:$0]  %s1300, 512, %s4, [#allocation4], 128, 128, 8
    $region25: #{tpu_custom_call.1} parent=1 // pred_fallthru
      _
    // Predicated region
    $region26: #{tpu_custom_call.1} parent=1 // pred_check
      _
    $region27: #{tpu_custom_call.1} parent=1 // pred_check_branch
      %1307 = sbr.rel (0) target = $region29
    $region28: #{tpu_custom_call.1} parent=1 // pred_region
      %1308 = dma.done [#allocation4], 512
    $region29: #{tpu_custom_call.1} parent=1 // pred_fallthru
      _
    %1309 = vsyncpa [#allocation3], 1
    %1310 = vsyncpa [#allocation4], 1

</llo_original>
